<compile_context>
chip_gen: v7x
topology: tpu7x:2x2x1
jax: 0.10.0
libtpu: 0.0.40
codegen_flags: <defaults>
</compile_context>

<pallas_src>
import functools
import math

import jax
import jax.numpy as jnp
import numpy as np
from jax.experimental import pallas as pl
from jax.experimental.pallas import tpu as pltpu  # noqa: F401  (imported per spec)

# ----------------------------- configuration -------------------------------
HIDDEN = 32          # cfg.hidden_size
INTER = 64           # cfg.intermediate_size
NUM_HEADS = 4        # cfg.num_attention_heads
HEAD_DIM = HIDDEN // NUM_HEADS
SEQ = 8              # number of tokens
BATCH = 2
EPS = 1e-6           # cfg.rms_norm_eps
# qkv_bias=True, use_bias=True for this synthetic config.

# Small-operand slab: one (8,128) f32 tile (exactly one vreg) holding every
# sub-512B operand so they arrive in a single DMA.
SLAB_ROWS, SLAB_LANES = 8, 128
ROW_NORM1, ROW_BQKV, ROW_BPROJ, ROW_NORM2, ROW_BFC13, ROW_BFC2 = 0, 1, 2, 3, 4, 5


def _rmsnorm(x, w):
    ms = jnp.mean(x * x, axis=-1, keepdims=True)
    return (x * jax.lax.rsqrt(ms + EPS)) * w


# ------------------------------- kernel ------------------------------------
def block_kernel(
    x_ref,       # (B, N, C)
    wqkv_ref,    # (C, 3C)   fused QKV weight, 1/sqrt(Dh) folded into Q columns
    wproj_ref,   # (C, C)
    wfc13_ref,   # (C, 2I)   fused [fc1 | fc3]
    wfc2_ref,    # (I, C)
    slab_ref,    # (8, 128)  packed norm weights + all biases
    o_ref,       # (B, N, C)
    *,
    batch: int,
    seq: int,
    num_heads: int,
    head_dim: int,
    inter: int,
):
    B, N, H, Dh, I = batch, seq, num_heads, head_dim, inter
    C = H * Dh
    T = B * N
    G = H * B

    x = x_ref[...].astype(jnp.float32).reshape(T, C)      # (T, C)
    slab = slab_ref[...]                                   # (8, 128) — one vreg

    n1     = slab[ROW_NORM1:ROW_NORM1 + 1, :C]
    b_qkv  = slab[ROW_BQKV:ROW_BQKV + 1, :3 * C]
    b_proj = slab[ROW_BPROJ:ROW_BPROJ + 1, :C]
    n2     = slab[ROW_NORM2:ROW_NORM2 + 1, :C]
    b_fc13 = slab[ROW_BFC13:ROW_BFC13 + 1, :2 * I]
    b_fc2  = slab[ROW_BFC2:ROW_BFC2 + 1, :C]

    # ---- RMSNorm1 + fused QKV: one (T,C)@(C,3C) matmul, one bias add ----
    h = _rmsnorm(x, n1)                                     # (T, C)
    qkv = jnp.dot(h, wqkv_ref[...],
                  preferred_element_type=jnp.float32) + b_qkv   # (T, 3C)

    # ---- split heads, g = h*B + b.  Only lane slices + leading/sublane
    #      reshapes (free: N == 8 aligns with the sublane tile). ----
    def split_heads(base):
        parts = [qkv[:, base + hh * Dh: base + (hh + 1) * Dh].reshape(1, B, N, Dh)
                 for hh in range(H)]
        return jnp.concatenate(parts, axis=0).reshape(G, N, Dh)   # (G, N, Dh)

    q = split_heads(0)          # scale already folded into Q weight/bias
    k = split_heads(C)
    v = split_heads(2 * C)

    # ---- attention: one batched score matmul + one fused softmax over all heads ----
    s = jnp.einsum("gnd,gmd->gnm", q, k,
                   preferred_element_type=jnp.float32)          # (G, N, N)
    s = s - jnp.max(s, axis=-1, keepdims=True)
    p = jnp.exp(s)
    p = p / jnp.sum(p, axis=-1, keepdims=True)   # exact division: keeps 1e-4 tol
    og = jnp.einsum("gnm,gmd->gnd", p, v,
                    preferred_element_type=jnp.float32)         # (G, N, Dh)

    # ---- merge heads back onto lanes; single (T,C)@(C,C) output projection ----
    og4 = og.reshape(H, B, N, Dh)
    a = jnp.concatenate([og4[hh].reshape(T, Dh) for hh in range(H)], axis=-1)  # (T, C)
    attn = jnp.dot(a, wproj_ref[...],
                   preferred_element_type=jnp.float32) + b_proj

    # ---- residual ----
    x = x + attn

    # ---- RMSNorm2 + SwiGLU FFN (fc1 and fc3 fused into one matmul) ----
    h2 = _rmsnorm(x, n2)
    f13 = jnp.dot(h2, wfc13_ref[...],
                  preferred_element_type=jnp.float32) + b_fc13   # (T, 2I)
    f1 = f13[:, :I]
    f3 = f13[:, I:]
    gated = (f1 * jax.nn.sigmoid(f1)) * f3
    f2 = jnp.dot(gated, wfc2_ref[...],
                 preferred_element_type=jnp.float32) + b_fc2

    # ---- residual + store ----
    o_ref[...] = (x + f2).astype(o_ref.dtype).reshape(B, N, C)


# --------------------------- one-time weight prep ----------------------------
def prepare_params(params, num_heads=NUM_HEADS):
    """Hoisted, one-time weight re-layout (outside the per-call hot path).

    - fuses the QKV weight/bias into (C,3C)/(3C,), folding 1/sqrt(Dh) into the
      Q columns,
    - fuses fc1/fc3 into a single (C, 2I) weight + (2I,) bias,
    - packs all tiny operands into one (8,128) f32 slab (single DMA).
    """
    C = params["norm1_w"].shape[0]
    H = num_heads
    Dh = C // H
    I = params["w_fc1"].shape[0]     # torch layout (I, C)
    assert 3 * C <= SLAB_LANES and 2 * I <= SLAB_LANES, "slab layout fits toy config only"
    scale = 1.0 / math.sqrt(Dh)

    # torch Linear layout: weight (out, in), bias (out,). QKV out index = s*C + h*Dh + d.
    col_scale = jnp.concatenate(
        [jnp.full((C,), scale, jnp.float32), jnp.ones((2 * C,), jnp.float32)])
    w_qkv = (params["w_qkv"] * col_scale[:, None]).T           # (C, 3C), Q scaled
    b_qkv = params["b_qkv"] * col_scale                         # (3C,)

    w_proj = params["w_proj"].T                                 # (C, C)
    w_fc13 = jnp.concatenate([params["w_fc1"].T, params["w_fc3"].T], axis=1)   # (C, 2I)
    w_fc2 = params["w_fc2"].T                                   # (I, C)
    b_fc13 = jnp.concatenate([params["b_fc1"], params["b_fc3"]])

    slab = jnp.zeros((SLAB_ROWS, SLAB_LANES), jnp.float32)
    slab = slab.at[ROW_NORM1, :C].set(params["norm1_w"])
    slab = slab.at[ROW_BQKV, :3 * C].set(b_qkv)
    slab = slab.at[ROW_BPROJ, :C].set(params["b_proj"])
    slab = slab.at[ROW_NORM2, :C].set(params["norm2_w"])
    slab = slab.at[ROW_BFC13, :2 * I].set(b_fc13)
    slab = slab.at[ROW_BFC2, :C].set(params["b_fc2"])

    return {"w_qkv": w_qkv, "w_proj": w_proj, "w_fc13": w_fc13, "w_fc2": w_fc2,
            "slab": slab, "num_heads": H, "inter": I}


# ------------------------------- wrapper ------------------------------------
def aimv2_block(x, prepped):
    """x: (B, N, C) float32. prepped: output of prepare_params (hoisted)."""
    B, N, C = x.shape
    H = prepped["num_heads"]
    kernel = functools.partial(
        block_kernel, batch=B, seq=N, num_heads=H, head_dim=C // H,
        inter=prepped["inter"])
    # Single grid-less step: whole problem + weights (~55 KiB) resident in VMEM.
    return pl.pallas_call(
        kernel,
        out_shape=jax.ShapeDtypeStruct((B, N, C), x.dtype),
    )(x, prepped["w_qkv"], prepped["w_proj"], prepped["w_fc13"],
      prepped["w_fc2"], prepped["slab"])


# --------------------------- pure-JAX reference ------------------------------
def block_ref(x, p):
    def rmsnorm(x, w):
        xf = x.astype(jnp.float32)
        return (xf * jax.lax.rsqrt(jnp.mean(xf * xf, -1, keepdims=True) + EPS)) * w

    B, N, C = x.shape
    h = rmsnorm(x, p["norm1_w"])
    qkv = h @ p["w_qkv"].T + p["b_qkv"]
    qkv = qkv.reshape(B, N, 3, NUM_HEADS, HEAD_DIM).transpose(2, 0, 3, 1, 4)
    q, k, v = qkv[0], qkv[1], qkv[2]                     # (B, H, N, Dh)
    s = jnp.einsum("bhnd,bhmd->bhnm", q, k) / math.sqrt(HEAD_DIM)
    pattn = jax.nn.softmax(s, axis=-1)
    a = jnp.einsum("bhnm,bhmd->bhnd", pattn, v).transpose(0, 2, 1, 3).reshape(B, N, C)
    x = x + (a @ p["w_proj"].T + p["b_proj"])
    h2 = rmsnorm(x, p["norm2_w"])
    f1 = h2 @ p["w_fc1"].T + p["b_fc1"]
    f3 = h2 @ p["w_fc3"].T + p["b_fc3"]
    return x + ((jax.nn.silu(f1) * f3) @ p["w_fc2"].T + p["b_fc2"])


# --------------------------------- main --------------------------------------
if __name__ == "__main__":
    key = jax.random.PRNGKey(0)
    keys = jax.random.split(key, 16)

    def w(k, shape, scale=0.05):
        return jax.random.normal(k, shape, dtype=jnp.float32) * scale

    params = {
        "norm1_w": jnp.ones((HIDDEN,), jnp.float32),
        "norm2_w": jnp.ones((HIDDEN,), jnp.float32),
        # torch.nn.Linear layout: weight (out, in), bias (out,)
        "w_qkv":  w(keys[0], (3 * HIDDEN, HIDDEN)),
        "b_qkv":  w(keys[1], (3 * HIDDEN,), 0.01),
        "w_proj": w(keys[2], (HIDDEN, HIDDEN)),
        "b_proj": w(keys[3], (HIDDEN,), 0.01),
        "w_fc1":  w(keys[4], (INTER, HIDDEN)),
        "b_fc1":  w(keys[5], (INTER,), 0.01),
        "w_fc3":  w(keys[6], (INTER, HIDDEN)),
        "b_fc3":  w(keys[7], (INTER,), 0.01),
        "w_fc2":  w(keys[8], (HIDDEN, INTER)),
        "b_fc2":  w(keys[9], (HIDDEN,), 0.01),
    }

    x = jax.random.normal(keys[10], (BATCH, SEQ, HIDDEN), dtype=jnp.float32)

    prepped = prepare_params(params)         # one-time, hoisted out of hot path
    out = aimv2_block(x, prepped)
    out = jax.block_until_ready(out)

    ref = block_ref(x, params)
    np.testing.assert_allclose(np.asarray(out), np.asarray(ref), rtol=1e-4, atol=1e-4)

    print("KERNEL_OK")
</pallas_src>

<mosaic_0001>
module attributes {stable_mosaic.version = 11 : i64} {
  func.func @block_kernel(%arg0: memref<2x8x32xf32, #tpu.memory_space<vmem>>, %arg1: memref<32x96xf32, #tpu.memory_space<vmem>>, %arg2: memref<32x32xf32, #tpu.memory_space<vmem>>, %arg3: memref<32x128xf32, #tpu.memory_space<vmem>>, %arg4: memref<64x32xf32, #tpu.memory_space<vmem>>, %arg5: memref<8x128xf32, #tpu.memory_space<vmem>>, %arg6: memref<2x8x32xf32, #tpu.memory_space<vmem>>) attributes {dimension_semantics = [], scalar_prefetch = 0 : i64, scratch_operands = 0 : i64, tpu.core_type = #tpu.core_type<tc>} {
    %c0 = arith.constant 0 : index
    %c0_0 = arith.constant 0 : index
    %c0_1 = arith.constant 0 : index
    %0 = vector.load %arg0[%c0, %c0_0, %c0_1] : memref<2x8x32xf32, #tpu.memory_space<vmem>>, vector<2x8x32xf32>
    %1 = vector.shape_cast %0 : vector<2x8x32xf32> to vector<16x32xf32>
    %c0_2 = arith.constant 0 : index
    %c0_3 = arith.constant 0 : index
    %2 = vector.load %arg5[%c0_2, %c0_3] : memref<8x128xf32, #tpu.memory_space<vmem>>, vector<8x128xf32>
    %3 = vector.extract_strided_slice %2 {offsets = [0, 0], sizes = [1, 32], strides = [1, 1]} : vector<8x128xf32> to vector<1x32xf32>
    %4 = vector.extract_strided_slice %2 {offsets = [1, 0], sizes = [1, 96], strides = [1, 1]} : vector<8x128xf32> to vector<1x96xf32>
    %5 = vector.extract_strided_slice %2 {offsets = [2, 0], sizes = [1, 32], strides = [1, 1]} : vector<8x128xf32> to vector<1x32xf32>
    %6 = vector.extract_strided_slice %2 {offsets = [3, 0], sizes = [1, 32], strides = [1, 1]} : vector<8x128xf32> to vector<1x32xf32>
    %7 = vector.extract_strided_slice %2 {offsets = [4, 0], sizes = [1, 128], strides = [1, 1]} : vector<8x128xf32> to vector<1x128xf32>
    %8 = vector.extract_strided_slice %2 {offsets = [5, 0], sizes = [1, 32], strides = [1, 1]} : vector<8x128xf32> to vector<1x32xf32>
    %9 = arith.mulf %1, %1 : vector<16x32xf32>
    %cst = arith.constant dense<0.000000e+00> : vector<16xf32>
    %10 = vector.multi_reduction <add>, %9, %cst [1] : vector<16x32xf32> to vector<16xf32>
    %11 = vector.shape_cast %10 : vector<16xf32> to vector<16x1xf32>
    %cst_4 = arith.constant 3.200000e+01 : f32
    %12 = vector.broadcast %cst_4 : f32 to vector<16x1xf32>
    %13 = arith.divf %11, %12 : vector<16x1xf32>
    %cst_5 = arith.constant 9.99999997E-7 : f32
    %14 = vector.broadcast %cst_5 : f32 to vector<16x1xf32>
    %15 = arith.addf %13, %14 : vector<16x1xf32>
    %16 = math.rsqrt %15 : vector<16x1xf32>
    %17 = vector.broadcast %16 : vector<16x1xf32> to vector<16x32xf32>
    %18 = arith.mulf %1, %17 : vector<16x32xf32>
    %19 = vector.broadcast %3 : vector<1x32xf32> to vector<16x32xf32>
    %20 = arith.mulf %18, %19 : vector<16x32xf32>
    %c0_6 = arith.constant 0 : index
    %c0_7 = arith.constant 0 : index
    %21 = vector.load %arg1[%c0_6, %c0_7] : memref<32x96xf32, #tpu.memory_space<vmem>>, vector<32x96xf32>
    %cst_8 = arith.constant dense<0.000000e+00> : vector<16x96xf32>
    %22 = tpu.matmul %20, %21, %cst_8 {dimension_numbers = #tpu.dot_dimension_numbers<[1], [0], [0], [1], [0, 0, 1, 1], [], []>} : vector<16x32xf32>, vector<32x96xf32>, vector<16x96xf32> -> vector<16x96xf32>
    %23 = vector.broadcast %4 : vector<1x96xf32> to vector<16x96xf32>
    %24 = arith.addf %22, %23 : vector<16x96xf32>
    %25 = vector.extract_strided_slice %24 {offsets = [0, 0], sizes = [16, 8], strides = [1, 1]} : vector<16x96xf32> to vector<16x8xf32>
    %26 = vector.shape_cast %25 : vector<16x8xf32> to vector<1x2x8x8xf32>
    %27 = vector.extract_strided_slice %24 {offsets = [0, 8], sizes = [16, 8], strides = [1, 1]} : vector<16x96xf32> to vector<16x8xf32>
    %28 = vector.shape_cast %27 : vector<16x8xf32> to vector<1x2x8x8xf32>
    %29 = vector.extract_strided_slice %24 {offsets = [0, 16], sizes = [16, 8], strides = [1, 1]} : vector<16x96xf32> to vector<16x8xf32>
    %30 = vector.shape_cast %29 : vector<16x8xf32> to vector<1x2x8x8xf32>
    %31 = vector.extract_strided_slice %24 {offsets = [0, 24], sizes = [16, 8], strides = [1, 1]} : vector<16x96xf32> to vector<16x8xf32>
    %32 = vector.shape_cast %31 : vector<16x8xf32> to vector<1x2x8x8xf32>
    %33 = tpu.concatenate %26, %28, %30, %32 in 0 : vector<1x2x8x8xf32>, vector<1x2x8x8xf32>, vector<1x2x8x8xf32>, vector<1x2x8x8xf32> -> vector<4x2x8x8xf32>
    %34 = vector.shape_cast %33 : vector<4x2x8x8xf32> to vector<8x8x8xf32>
    %35 = vector.extract_strided_slice %24 {offsets = [0, 32], sizes = [16, 8], strides = [1, 1]} : vector<16x96xf32> to vector<16x8xf32>
    %36 = vector.shape_cast %35 : vector<16x8xf32> to vector<1x2x8x8xf32>
    %37 = vector.extract_strided_slice %24 {offsets = [0, 40], sizes = [16, 8], strides = [1, 1]} : vector<16x96xf32> to vector<16x8xf32>
    %38 = vector.shape_cast %37 : vector<16x8xf32> to vector<1x2x8x8xf32>
    %39 = vector.extract_strided_slice %24 {offsets = [0, 48], sizes = [16, 8], strides = [1, 1]} : vector<16x96xf32> to vector<16x8xf32>
    %40 = vector.shape_cast %39 : vector<16x8xf32> to vector<1x2x8x8xf32>
    %41 = vector.extract_strided_slice %24 {offsets = [0, 56], sizes = [16, 8], strides = [1, 1]} : vector<16x96xf32> to vector<16x8xf32>
    %42 = vector.shape_cast %41 : vector<16x8xf32> to vector<1x2x8x8xf32>
    %43 = tpu.concatenate %36, %38, %40, %42 in 0 : vector<1x2x8x8xf32>, vector<1x2x8x8xf32>, vector<1x2x8x8xf32>, vector<1x2x8x8xf32> -> vector<4x2x8x8xf32>
    %44 = vector.shape_cast %43 : vector<4x2x8x8xf32> to vector<8x8x8xf32>
    %45 = vector.extract_strided_slice %24 {offsets = [0, 64], sizes = [16, 8], strides = [1, 1]} : vector<16x96xf32> to vector<16x8xf32>
    %46 = vector.shape_cast %45 : vector<16x8xf32> to vector<1x2x8x8xf32>
    %47 = vector.extract_strided_slice %24 {offsets = [0, 72], sizes = [16, 8], strides = [1, 1]} : vector<16x96xf32> to vector<16x8xf32>
    %48 = vector.shape_cast %47 : vector<16x8xf32> to vector<1x2x8x8xf32>
    %49 = vector.extract_strided_slice %24 {offsets = [0, 80], sizes = [16, 8], strides = [1, 1]} : vector<16x96xf32> to vector<16x8xf32>
    %50 = vector.shape_cast %49 : vector<16x8xf32> to vector<1x2x8x8xf32>
    %51 = vector.extract_strided_slice %24 {offsets = [0, 88], sizes = [16, 8], strides = [1, 1]} : vector<16x96xf32> to vector<16x8xf32>
    %52 = vector.shape_cast %51 : vector<16x8xf32> to vector<1x2x8x8xf32>
    %53 = tpu.concatenate %46, %48, %50, %52 in 0 : vector<1x2x8x8xf32>, vector<1x2x8x8xf32>, vector<1x2x8x8xf32>, vector<1x2x8x8xf32> -> vector<4x2x8x8xf32>
    %54 = vector.shape_cast %53 : vector<4x2x8x8xf32> to vector<8x8x8xf32>
    "tpu.trace_start"() <{level = 10 : i32, message = "gnd,gmd->gnm"}> : () -> ()
    %cst_9 = arith.constant dense<0.000000e+00> : vector<8x8x8xf32>
    %55 = tpu.matmul %34, %44, %cst_9 {dimension_numbers = #tpu.dot_dimension_numbers<[2], [2], [1], [1], [0, 0, 0, 1, 1, 1], [0], [0]>} : vector<8x8x8xf32>, vector<8x8x8xf32>, vector<8x8x8xf32> -> vector<8x8x8xf32>
    "tpu.trace_stop"() : () -> ()
    %cst_10 = arith.constant dense<0xFF800000> : vector<8x8xf32>
    %56 = vector.multi_reduction <maximumf>, %55, %cst_10 [2] : vector<8x8x8xf32> to vector<8x8xf32>
    %57 = vector.shape_cast %56 : vector<8x8xf32> to vector<8x8x1xf32>
    %58 = vector.broadcast %57 : vector<8x8x1xf32> to vector<8x8x8xf32>
    %59 = arith.subf %55, %58 : vector<8x8x8xf32>
    %60 = math.exp %59 : vector<8x8x8xf32>
    %cst_11 = arith.constant dense<0.000000e+00> : vector<8x8xf32>
    %61 = vector.multi_reduction <add>, %60, %cst_11 [2] : vector<8x8x8xf32> to vector<8x8xf32>
    %62 = vector.shape_cast %61 : vector<8x8xf32> to vector<8x8x1xf32>
    %63 = vector.broadcast %62 : vector<8x8x1xf32> to vector<8x8x8xf32>
    %64 = arith.divf %60, %63 : vector<8x8x8xf32>
    "tpu.trace_start"() <{level = 10 : i32, message = "gnm,gmd->gnd"}> : () -> ()
    %cst_12 = arith.constant dense<0.000000e+00> : vector<8x8x8xf32>
    %65 = tpu.matmul %64, %54, %cst_12 {dimension_numbers = #tpu.dot_dimension_numbers<[2], [1], [1], [2], [0, 0, 0, 1, 1, 2], [0], [0]>} : vector<8x8x8xf32>, vector<8x8x8xf32>, vector<8x8x8xf32> -> vector<8x8x8xf32>
    "tpu.trace_stop"() : () -> ()
    %66 = vector.shape_cast %65 : vector<8x8x8xf32> to vector<4x2x8x8xf32>
    %67 = vector.extract_strided_slice %66 {offsets = [0, 0, 0, 0], sizes = [1, 2, 8, 8], strides = [1, 1, 1, 1]} : vector<4x2x8x8xf32> to vector<1x2x8x8xf32>
    %68 = vector.shape_cast %67 : vector<1x2x8x8xf32> to vector<2x8x8xf32>
    %69 = vector.shape_cast %68 : vector<2x8x8xf32> to vector<16x8xf32>
    %70 = vector.extract_strided_slice %66 {offsets = [1, 0, 0, 0], sizes = [1, 2, 8, 8], strides = [1, 1, 1, 1]} : vector<4x2x8x8xf32> to vector<1x2x8x8xf32>
    %71 = vector.shape_cast %70 : vector<1x2x8x8xf32> to vector<2x8x8xf32>
    %72 = vector.shape_cast %71 : vector<2x8x8xf32> to vector<16x8xf32>
    %73 = vector.extract_strided_slice %66 {offsets = [2, 0, 0, 0], sizes = [1, 2, 8, 8], strides = [1, 1, 1, 1]} : vector<4x2x8x8xf32> to vector<1x2x8x8xf32>
    %74 = vector.shape_cast %73 : vector<1x2x8x8xf32> to vector<2x8x8xf32>
    %75 = vector.shape_cast %74 : vector<2x8x8xf32> to vector<16x8xf32>
    %76 = vector.extract_strided_slice %66 {offsets = [3, 0, 0, 0], sizes = [1, 2, 8, 8], strides = [1, 1, 1, 1]} : vector<4x2x8x8xf32> to vector<1x2x8x8xf32>
    %77 = vector.shape_cast %76 : vector<1x2x8x8xf32> to vector<2x8x8xf32>
    %78 = vector.shape_cast %77 : vector<2x8x8xf32> to vector<16x8xf32>
    %79 = tpu.concatenate %69, %72, %75, %78 in 1 : vector<16x8xf32>, vector<16x8xf32>, vector<16x8xf32>, vector<16x8xf32> -> vector<16x32xf32>
    %c0_13 = arith.constant 0 : index
    %c0_14 = arith.constant 0 : index
    %80 = vector.load %arg2[%c0_13, %c0_14] : memref<32x32xf32, #tpu.memory_space<vmem>>, vector<32x32xf32>
    %cst_15 = arith.constant dense<0.000000e+00> : vector<16x32xf32>
    %81 = tpu.matmul %79, %80, %cst_15 {dimension_numbers = #tpu.dot_dimension_numbers<[1], [0], [0], [1], [0, 0, 1, 1], [], []>} : vector<16x32xf32>, vector<32x32xf32>, vector<16x32xf32> -> vector<16x32xf32>
    %82 = vector.broadcast %5 : vector<1x32xf32> to vector<16x32xf32>
    %83 = arith.addf %81, %82 : vector<16x32xf32>
    %84 = arith.addf %1, %83 : vector<16x32xf32>
    %85 = arith.mulf %84, %84 : vector<16x32xf32>
    %cst_16 = arith.constant dense<0.000000e+00> : vector<16xf32>
    %86 = vector.multi_reduction <add>, %85, %cst_16 [1] : vector<16x32xf32> to vector<16xf32>
    %87 = vector.shape_cast %86 : vector<16xf32> to vector<16x1xf32>
    %cst_17 = arith.constant 3.200000e+01 : f32
    %88 = vector.broadcast %cst_17 : f32 to vector<16x1xf32>
    %89 = arith.divf %87, %88 : vector<16x1xf32>
    %cst_18 = arith.constant 9.99999997E-7 : f32
    %90 = vector.broadcast %cst_18 : f32 to vector<16x1xf32>
    %91 = arith.addf %89, %90 : vector<16x1xf32>
    %92 = math.rsqrt %91 : vector<16x1xf32>
    %93 = vector.broadcast %92 : vector<16x1xf32> to vector<16x32xf32>
    %94 = arith.mulf %84, %93 : vector<16x32xf32>
    %95 = vector.broadcast %6 : vector<1x32xf32> to vector<16x32xf32>
    %96 = arith.mulf %94, %95 : vector<16x32xf32>
    %c0_19 = arith.constant 0 : index
    %c0_20 = arith.constant 0 : index
    %97 = vector.load %arg3[%c0_19, %c0_20] : memref<32x128xf32, #tpu.memory_space<vmem>>, vector<32x128xf32>
    %cst_21 = arith.constant dense<0.000000e+00> : vector<16x128xf32>
    %98 = tpu.matmul %96, %97, %cst_21 {dimension_numbers = #tpu.dot_dimension_numbers<[1], [0], [0], [1], [0, 0, 1, 1], [], []>} : vector<16x32xf32>, vector<32x128xf32>, vector<16x128xf32> -> vector<16x128xf32>
    %99 = vector.broadcast %7 : vector<1x128xf32> to vector<16x128xf32>
    %100 = arith.addf %98, %99 : vector<16x128xf32>
    %101 = vector.extract_strided_slice %100 {offsets = [0, 0], sizes = [16, 64], strides = [1, 1]} : vector<16x128xf32> to vector<16x64xf32>
    %102 = vector.extract_strided_slice %100 {offsets = [0, 64], sizes = [16, 64], strides = [1, 1]} : vector<16x128xf32> to vector<16x64xf32>
    %103 = arith.negf %101 : vector<16x64xf32>
    %104 = math.exp %103 : vector<16x64xf32>
    %cst_22 = arith.constant 1.000000e+00 : f32
    %105 = vector.broadcast %cst_22 : f32 to vector<16x64xf32>
    %106 = arith.addf %105, %104 : vector<16x64xf32>
    %107 = arith.divf %105, %106 : vector<16x64xf32>
    %108 = arith.mulf %101, %107 : vector<16x64xf32>
    %109 = arith.mulf %108, %102 : vector<16x64xf32>
    %c0_23 = arith.constant 0 : index
    %c0_24 = arith.constant 0 : index
    %110 = vector.load %arg4[%c0_23, %c0_24] : memref<64x32xf32, #tpu.memory_space<vmem>>, vector<64x32xf32>
    %cst_25 = arith.constant dense<0.000000e+00> : vector<16x32xf32>
    %111 = tpu.matmul %109, %110, %cst_25 {dimension_numbers = #tpu.dot_dimension_numbers<[1], [0], [0], [1], [0, 0, 1, 1], [], []>} : vector<16x64xf32>, vector<64x32xf32>, vector<16x32xf32> -> vector<16x32xf32>
    %112 = vector.broadcast %8 : vector<1x32xf32> to vector<16x32xf32>
    %113 = arith.addf %111, %112 : vector<16x32xf32>
    %114 = arith.addf %84, %113 : vector<16x32xf32>
    %115 = vector.shape_cast %114 : vector<16x32xf32> to vector<2x8x32xf32>
    %c0_26 = arith.constant 0 : index
    %c0_27 = arith.constant 0 : index
    %c0_28 = arith.constant 0 : index
    %116 = vector.load %arg6[%c0_26, %c0_27, %c0_28] : memref<2x8x32xf32, #tpu.memory_space<vmem>>, vector<2x8x32xf32>
    tpu.vector_store %arg6[%c0_26, %c0_27, %c0_28], %115 {strides = array<i32>} : memref<2x8x32xf32, #tpu.memory_space<vmem>>, vector<2x8x32xf32>,
    return
  }
}

</mosaic_0001>

<llo_original>
// kernel: tpu_custom_call.1
$region0: #{tpu_custom_call.1}
  #allocation0 [shape = 'u32[]', space=smem, size = 0x4, offset = 0x4, fixed_abs, tag = 'smem constant byte address 0x4 - core index']
  #allocation1 [shape = 'u32[144,128]{1,0:T(1,128)}', space=vmem, size = 0x12000, scoped, tag = 'internal scratch']
  %s0 = inlined_call_operand.hbm [shape: f32[2,8,32], index: 0, kind: input, shape index: {}]
  %s1 = inlined_call_operand.vmem [shape: f32[32,96], index: 1, kind: input, shape index: {}]
  %s2 = inlined_call_operand.vmem [shape: f32[32,32], index: 2, kind: input, shape index: {}]
  %s3 = inlined_call_operand.vmem [shape: f32[32,128], index: 3, kind: input, shape index: {}]
  %s4 = inlined_call_operand.vmem [shape: f32[64,32], index: 4, kind: input, shape index: {}]
  %s5 = inlined_call_operand.vmem [shape: f32[8,128], index: 5, kind: input, shape index: {}]
  %s6 = inlined_call_operand.hbm [shape: f32[2,8,32], index: 6, kind: output, shape index: {}]
  %s7 = sld [smem:[#allocation0]]
  $region38: #{tpu_custom_call.1} parent=0
    _
  %s9 = ssub.s32 1, %s7
  %s10 = scalar_select 0, %s9, %s7
  $region1: #{tpu_custom_call.1} parent=0
    #allocation2 [shape = 'u8[8192]{0}', space=vmem, size = 0x2000, scoped, tag = 'input window, operand 0, single buffered']
    #allocation3 [shape = 's32[1]{0}', space=sflag, size = 0x4, scoped, tag = 'scoped memory for tpu_custom_call.1']
    #allocation4 [shape = 's32[1]{0}', space=sflag, size = 0x4, scoped, tag = 'scoped memory for tpu_custom_call.1']
    #allocation5 [shape = 'u8[8192]{0}', space=vmem, size = 0x2000, scoped, tag = 'output window, operand 0, single buffered']
    %11 = vsyncpa [#allocation3], 0
    %12 = vsyncpa [#allocation4], 0
    // Predicated region
    $region2: #{tpu_custom_call.1} parent=1 // pred_check
      _
    $region3: #{tpu_custom_call.1} parent=1 // pred_check_branch
      %14 = sbr.rel (0) target = $region5
    $region4: #{tpu_custom_call.1} parent=1 // pred_region
      %s16 = ssub.s32 256, 256
      %17 = vsyncadd [#allocation3], %s16
      %s18 = sshll.u32 [#allocation2], 4
      %s19 = int_to_ptr.vmem [resolvable:$true] %s18
      %24 = dma.hbm_to_vmem [thread:$0]  %s0, 256, %s19, [#allocation3], 128, 128, 8
    $region5: #{tpu_custom_call.1} parent=1 // pred_fallthru
      _
    // Predicated region
    $region6: #{tpu_custom_call.1} parent=1 // pred_check
      _
    $region7: #{tpu_custom_call.1} parent=1 // pred_check_branch
      %26 = sbr.rel (0) target = $region9
    $region8: #{tpu_custom_call.1} parent=1 // pred_region
      _
    $region9: #{tpu_custom_call.1} parent=1 // pred_fallthru
      _
    // Predicated region
    $region10: #{tpu_custom_call.1} parent=1 // pred_check
      _
    $region11: #{tpu_custom_call.1} parent=1 // pred_check_branch
      %28 = sbr.rel (0) target = $region13
    $region12: #{tpu_custom_call.1} parent=1 // pred_region
      _
    $region13: #{tpu_custom_call.1} parent=1 // pred_fallthru
      _
    // Predicated region
    $region14: #{tpu_custom_call.1} parent=1 // pred_check
      _
    $region15: #{tpu_custom_call.1} parent=1 // pred_check_branch
      %30 = sbr.rel (0) target = $region17
    $region16: #{tpu_custom_call.1} parent=1 // pred_region
      _
    $region17: #{tpu_custom_call.1} parent=1 // pred_fallthru
      _
    // Predicated region
    $region18: #{tpu_custom_call.1} parent=1 // pred_check
      _
    $region19: #{tpu_custom_call.1} parent=1 // pred_check_branch
      %32 = sbr.rel (0) target = $region21
    $region20: #{tpu_custom_call.1} parent=1 // pred_region
      _
    $region21: #{tpu_custom_call.1} parent=1 // pred_fallthru
      _
    // Predicated region
    $region22: #{tpu_custom_call.1} parent=1 // pred_check
      _
    $region23: #{tpu_custom_call.1} parent=1 // pred_check_branch
      %34 = sbr.rel (0) target = $region25
    $region24: #{tpu_custom_call.1} parent=1 // pred_region
      _
    $region25: #{tpu_custom_call.1} parent=1 // pred_fallthru
      _
    // Predicated region
    $region26: #{tpu_custom_call.1} parent=1 // pred_check
      _
    $region27: #{tpu_custom_call.1} parent=1 // pred_check_branch
      %36 = sbr.rel (0) target = $region29
    $region28: #{tpu_custom_call.1} parent=1 // pred_region
      %37 = dma.done [#allocation3], 256
    $region29: #{tpu_custom_call.1} parent=1 // pred_fallthru
      _
    %v38 = vld [vmem:[#allocation2] sm:$0xff]
    %v39 = vld [vmem:[#allocation2 + $0x8] sm:$0xff]
    %v40 = vld [vmem:[%s5] sm:$0xff]
    %v41 = vmul.f32 %v38, %v38
    %v42 = vmul.f32 %v39, %v39
    %vm43 = vcmask 261120
    %v44 = vsel %vm43, %v41, 0.0
    %45 = vadd.xlane.f32.xlu0 %v44
    %v46 = vpop.xlane.xlu0 %45
    %v47 = vsel %vm43, %v42, 0.0
    %48 = vadd.xlane.f32.xlu0 %v47
    %v49 = vpop.xlane.xlu0 %48
    %v50 = vrcp.pop 32.0
    %v51 = vmul.f32 %v46, %v50
    %v52 = vmul.f32 %v49, %v50
    %v53 = vadd.f32 %v51, 1e-06
    %v54 = vadd.f32 %v52, 1e-06
    %v55 = vrsqrt.pop %v53
    %v56 = vrsqrt.pop %v54
    %v57 = vmul.f32 %v38, %v55
    %v58 = vmul.f32 %v39, %v56
    %v59 = vlaneseq
    %v60 = vshrl.u32 %v59, 7
    %v61 = vsub.s32 0, %v60
    %v62 = vrot.slane %v40, %v61
    %v63 = vmul.f32 %v57, %v62
    %v64 = vmul.f32 %v58, %v62
    %v65 = vld [vmem:[%s1] sm:$0xff]
    %v66 = vld [vmem:[%s1 + $0x8] sm:$0xff]
    %v67 = vld [vmem:[%s1 + $0x10] sm:$0xff]
    %v68 = vld [vmem:[%s1 + $0x18] sm:$0xff]
    %v69 = vlaneseq
    %v70 = vshrl.u32 %v69, 7
    %v71 = vsub.s32 1, %v70
    %v72 = vrot.slane %v40, %v71
    %v74 = vsel %vm43, %v63, 0
    %v77 = vsel %vm43, %v64, 0
    %79 = vmatprep.subr.mxu0 0.0
    %80 = vmatpush1.msra.mxu0 %v65
    %81 = vmatprep.subr.mxu0 0.0
    %82 = vmatpush1.msra.mxu0 %v66
    %83 = vmatprep.subr.mxu0 0.0
    %84 = vmatpush1.msra.mxu0 %v67
    %85 = vmatprep.subr.mxu0 0.0
    %86 = vmatpush1.msra.mxu0 %v68
    %87 = vmatprep.subr.mxu0 0.0
    %88 = vmatpush1.msra.mxu0 0.0
    %89 = vmatprep.subr.mxu0 0.0
    %90 = vmatpush1.msra.mxu0 0.0
    %91 = vmatprep.subr.mxu0 0.0
    %92 = vmatpush1.msra.mxu0 0.0
    %93 = vmatprep.subr.mxu0 0.0
    %94 = vmatpush1.msra.mxu0 0.0
    %95 = vmatprep.subr.mxu0 0.0
    %96 = vmatpush1.msra.mxu0 0.0
    %97 = vmatprep.subr.mxu0 0.0
    %98 = vmatpush1.msra.mxu0 0.0
    %99 = vmatprep.subr.mxu0 0.0
    %100 = vmatpush1.msra.mxu0 0.0
    %101 = vmatprep.subr.mxu0 0.0
    %102 = vmatpush1.msra.mxu0 0.0
    %103 = vmatprep.subr.mxu0 0.0
    %104 = vmatpush1.msra.mxu0 0.0
    %105 = vmatprep.subr.mxu0 0.0
    %106 = vmatpush1.msra.mxu0 0.0
    %107 = vmatprep.subr.mxu0 0.0
    %108 = vmatpush1.msra.mxu0 0.0
    %109 = vmatprep.subr.mxu0 0.0
    %110 = vmatpush1.msra.mxu0 0.0
    %111 = vmatprep.subr.mxu0 0.0
    %112 = vmatpush1.msra.mxu0 0.0
    %113 = vmatprep.subr.mxu0 0.0
    %114 = vmatpush1.msra.mxu0 0.0
    %115 = vmatprep.subr.mxu0 0.0
    %116 = vmatpush1.msra.mxu0 0.0
    %117 = vmatprep.subr.mxu0 0.0
    %118 = vmatpush1.msra.mxu0 0.0
    %119 = vmatprep.subr.mxu0 0.0
    %120 = vmatpush1.msra.mxu0 0.0
    %121 = vmatprep.subr.mxu0 0.0
    %122 = vmatpush1.msra.mxu0 0.0
    %123 = vmatprep.subr.mxu0 0.0
    %124 = vmatpush1.msra.mxu0 0.0
    %125 = vmatprep.subr.mxu0 0.0
    %126 = vmatpush1.msra.mxu0 0.0
    %127 = vmatprep.subr.mxu0 0.0
    %128 = vmatpush1.msra.mxu0 0.0
    %129 = vmatprep.subr.mxu0 0.0
    %130 = vmatpush1.msra.mxu0 0.0
    %131 = vmatprep.subr.mxu0 0.0
    %132 = vmatpush1.msra.mxu0 0.0
    %133 = vmatprep.subr.mxu0 0.0
    %134 = vmatpush1.msra.mxu0 0.0
    %135 = vmatprep.subr.mxu0 0.0
    %136 = vmatpush1.msra.mxu0 0.0
    %137 = vmatprep.subr.mxu0 0.0
    %138 = vmatpush1.msra.mxu0 0.0
    %139 = vmatprep.subr.mxu0 0.0
    %140 = vmatpush1.msra.mxu0 0.0
    %141 = vmatprep.subr.mxu0 0.0
    %142 = vmatpush1.msra.mxu0 0.0
    %143 = vmatprep.mubr.f32.mxu0 0.0
    %144 = vmatmul.mubr.f32.gmra.mrb[0].mxu0 %v74
    %v145 = vpop.f32.mrb[0].mxu0
    %v146 = vadd.f32 %v72, %v145
    %v147 = vpop.f32.mrb[0].mxu0
    %148 = vmatprep.mubr.f32.mxu0 0.0
    %149 = vmatmul.mubr.f32.gmra.mrb[0].mxu0 %v77
    %v150 = vpop.f32.mrb[0].mxu0
    %v151 = vadd.f32 %v72, %v150
    %v152 = vpop.f32.mrb[0].mxu0
    %153 = vdwg.mxu0
    %156 = vrot.lane.b32.xlu0 %v146, 120
    %v157 = vpop.permute.xlu0 %156
    %158 = vrot.lane.b32.xlu0 %v151, 120
    %v159 = vpop.permute.xlu0 %158
    %160 = vrot.lane.b32.xlu0 %v146, 112
    %v161 = vpop.permute.xlu0 %160
    %162 = vrot.lane.b32.xlu0 %v151, 112
    %v163 = vpop.permute.xlu0 %162
    %164 = vrot.lane.b32.xlu0 %v146, 104
    %v165 = vpop.permute.xlu0 %164
    %166 = vrot.lane.b32.xlu0 %v151, 104
    %v167 = vpop.permute.xlu0 %166
    %168 = vrot.lane.b32.xlu0 %v146, 96
    %v169 = vpop.permute.xlu0 %168
    %vm170 = vcmask 64512
    %v171 = vsel %vm170, %v146, 0
    %v173 = vsel %vm170, %v169, 0
    %175 = vmatprep.subr.mxu0 0.0
    %176 = vmatpush1.xpose.msra.mxu0 %v173
    %177 = vmatprep.subr.mxu0 0.0
    %178 = vmatpush1.xpose.msra.mxu0 0.0
    %179 = vmatprep.subr.mxu0 0.0
    %180 = vmatpush1.xpose.msra.mxu0 0.0
    %181 = vmatprep.subr.mxu0 0.0
    %182 = vmatpush1.xpose.msra.mxu0 0.0
    %183 = vmatprep.subr.mxu0 0.0
    %184 = vmatpush1.xpose.msra.mxu0 0.0
    %185 = vmatprep.subr.mxu0 0.0
    %186 = vmatpush1.xpose.msra.mxu0 0.0
    %187 = vmatprep.subr.mxu0 0.0
    %188 = vmatpush1.xpose.msra.mxu0 0.0
    %189 = vmatprep.subr.mxu0 0.0
    %190 = vmatpush1.xpose.msra.mxu0 0.0
    %191 = vmatprep.subr.mxu0 0.0
    %192 = vmatpush1.xpose.msra.mxu0 0.0
    %193 = vmatprep.subr.mxu0 0.0
    %194 = vmatpush1.xpose.msra.mxu0 0.0
    %195 = vmatprep.subr.mxu0 0.0
    %196 = vmatpush1.xpose.msra.mxu0 0.0
    %197 = vmatprep.subr.mxu0 0.0
    %198 = vmatpush1.xpose.msra.mxu0 0.0
    %199 = vmatprep.subr.mxu0 0.0
    %200 = vmatpush1.xpose.msra.mxu0 0.0
    %201 = vmatprep.subr.mxu0 0.0
    %202 = vmatpush1.xpose.msra.mxu0 0.0
    %203 = vmatprep.subr.mxu0 0.0
    %204 = vmatpush1.xpose.msra.mxu0 0.0
    %205 = vmatprep.subr.mxu0 0.0
    %206 = vmatpush1.xpose.msra.mxu0 0.0
    %207 = vmatprep.subr.mxu0 0.0
    %208 = vmatpush1.xpose.msra.mxu0 0.0
    %209 = vmatprep.subr.mxu0 0.0
    %210 = vmatpush1.xpose.msra.mxu0 0.0
    %211 = vmatprep.subr.mxu0 0.0
    %212 = vmatpush1.xpose.msra.mxu0 0.0
    %213 = vmatprep.subr.mxu0 0.0
    %214 = vmatpush1.xpose.msra.mxu0 0.0
    %215 = vmatprep.subr.mxu0 0.0
    %216 = vmatpush1.xpose.msra.mxu0 0.0
    %217 = vmatprep.subr.mxu0 0.0
    %218 = vmatpush1.xpose.msra.mxu0 0.0
    %219 = vmatprep.subr.mxu0 0.0
    %220 = vmatpush1.xpose.msra.mxu0 0.0
    %221 = vmatprep.subr.mxu0 0.0
    %222 = vmatpush1.xpose.msra.mxu0 0.0
    %223 = vmatprep.subr.mxu0 0.0
    %224 = vmatpush1.xpose.msra.mxu0 0.0
    %225 = vmatprep.subr.mxu0 0.0
    %226 = vmatpush1.xpose.msra.mxu0 0.0
    %227 = vmatprep.subr.mxu0 0.0
    %228 = vmatpush1.xpose.msra.mxu0 0.0
    %229 = vmatprep.subr.mxu0 0.0
    %230 = vmatpush1.xpose.msra.mxu0 0.0
    %231 = vmatprep.subr.mxu0 0.0
    %232 = vmatpush1.xpose.msra.mxu0 0.0
    %233 = vmatprep.subr.mxu0 0.0
    %234 = vmatpush1.xpose.msra.mxu0 0.0
    %235 = vmatprep.subr.mxu0 0.0
    %236 = vmatpush1.xpose.msra.mxu0 0.0
    %237 = vmatprep.subr.mxu0 0.0
    %238 = vmatpush1.xpose.msra.mxu0 0.0
    %239 = vmatprep.mubr.f32.mxu0 0.0
    %240 = vmatmul.mubr.f32.gmra.mrb[0].mxu0 %v171
    %v241 = vpop.f32.mrb[0].mxu0
    %v242 = vadd.f32 0.0, %v241
    %v243 = vpop.f32.mrb[0].mxu0
    %244 = vdwg.mxu0
    %245 = vrot.lane.b32.xlu0 %v151, 96
    %v246 = vpop.permute.xlu0 %245
    %v247 = vsel %vm170, %v151, 0
    %v249 = vsel %vm170, %v246, 0
    %251 = vmatprep.subr.mxu0 0.0
    %252 = vmatpush1.xpose.msra.mxu0 %v249
    %253 = vmatprep.subr.mxu0 0.0
    %254 = vmatpush1.xpose.msra.mxu0 0.0
    %255 = vmatprep.subr.mxu0 0.0
    %256 = vmatpush1.xpose.msra.mxu0 0.0
    %257 = vmatprep.subr.mxu0 0.0
    %258 = vmatpush1.xpose.msra.mxu0 0.0
    %259 = vmatprep.subr.mxu0 0.0
    %260 = vmatpush1.xpose.msra.mxu0 0.0
    %261 = vmatprep.subr.mxu0 0.0
    %262 = vmatpush1.xpose.msra.mxu0 0.0
    %263 = vmatprep.subr.mxu0 0.0
    %264 = vmatpush1.xpose.msra.mxu0 0.0
    %265 = vmatprep.subr.mxu0 0.0
    %266 = vmatpush1.xpose.msra.mxu0 0.0
    %267 = vmatprep.subr.mxu0 0.0
    %268 = vmatpush1.xpose.msra.mxu0 0.0
    %269 = vmatprep.subr.mxu0 0.0
    %270 = vmatpush1.xpose.msra.mxu0 0.0
    %271 = vmatprep.subr.mxu0 0.0
    %272 = vmatpush1.xpose.msra.mxu0 0.0
    %273 = vmatprep.subr.mxu0 0.0
    %274 = vmatpush1.xpose.msra.mxu0 0.0
    %275 = vmatprep.subr.mxu0 0.0
    %276 = vmatpush1.xpose.msra.mxu0 0.0
    %277 = vmatprep.subr.mxu0 0.0
    %278 = vmatpush1.xpose.msra.mxu0 0.0
    %279 = vmatprep.subr.mxu0 0.0
    %280 = vmatpush1.xpose.msra.mxu0 0.0
    %281 = vmatprep.subr.mxu0 0.0
    %282 = vmatpush1.xpose.msra.mxu0 0.0
    %283 = vmatprep.subr.mxu0 0.0
    %284 = vmatpush1.xpose.msra.mxu0 0.0
    %285 = vmatprep.subr.mxu0 0.0
    %286 = vmatpush1.xpose.msra.mxu0 0.0
    %287 = vmatprep.subr.mxu0 0.0
    %288 = vmatpush1.xpose.msra.mxu0 0.0
    %289 = vmatprep.subr.mxu0 0.0
    %290 = vmatpush1.xpose.msra.mxu0 0.0
    %291 = vmatprep.subr.mxu0 0.0
    %292 = vmatpush1.xpose.msra.mxu0 0.0
    %293 = vmatprep.subr.mxu0 0.0
    %294 = vmatpush1.xpose.msra.mxu0 0.0
    %295 = vmatprep.subr.mxu0 0.0
    %296 = vmatpush1.xpose.msra.mxu0 0.0
    %297 = vmatprep.subr.mxu0 0.0
    %298 = vmatpush1.xpose.msra.mxu0 0.0
    %299 = vmatprep.subr.mxu0 0.0
    %300 = vmatpush1.xpose.msra.mxu0 0.0
    %301 = vmatprep.subr.mxu0 0.0
    %302 = vmatpush1.xpose.msra.mxu0 0.0
    %303 = vmatprep.subr.mxu0 0.0
    %304 = vmatpush1.xpose.msra.mxu0 0.0
    %305 = vmatprep.subr.mxu0 0.0
    %306 = vmatpush1.xpose.msra.mxu0 0.0
    %307 = vmatprep.subr.mxu0 0.0
    %308 = vmatpush1.xpose.msra.mxu0 0.0
    %309 = vmatprep.subr.mxu0 0.0
    %310 = vmatpush1.xpose.msra.mxu0 0.0
    %311 = vmatprep.subr.mxu0 0.0
    %312 = vmatpush1.xpose.msra.mxu0 0.0
    %313 = vmatprep.subr.mxu0 0.0
    %314 = vmatpush1.xpose.msra.mxu0 0.0
    %315 = vmatprep.mubr.f32.mxu0 0.0
    %316 = vmatmul.mubr.f32.gmra.mrb[0].mxu0 %v247
    %v317 = vpop.f32.mrb[0].mxu0
    %v318 = vadd.f32 0.0, %v317
    %v319 = vpop.f32.mrb[0].mxu0
    %320 = vdwg.mxu0
    %321 = vrot.lane.b32.xlu0 %v157, 96
    %v322 = vpop.permute.xlu0 %321
    %v323 = vsel %vm170, %v157, 0
    %v325 = vsel %vm170, %v322, 0
    %327 = vmatprep.subr.mxu0 0.0
    %328 = vmatpush1.xpose.msra.mxu0 %v325
    %329 = vmatprep.subr.mxu0 0.0
    %330 = vmatpush1.xpose.msra.mxu0 0.0
    %331 = vmatprep.subr.mxu0 0.0
    %332 = vmatpush1.xpose.msra.mxu0 0.0
    %333 = vmatprep.subr.mxu0 0.0
    %334 = vmatpush1.xpose.msra.mxu0 0.0
    %335 = vmatprep.subr.mxu0 0.0
    %336 = vmatpush1.xpose.msra.mxu0 0.0
    %337 = vmatprep.subr.mxu0 0.0
    %338 = vmatpush1.xpose.msra.mxu0 0.0
    %339 = vmatprep.subr.mxu0 0.0
    %340 = vmatpush1.xpose.msra.mxu0 0.0
    %341 = vmatprep.subr.mxu0 0.0
    %342 = vmatpush1.xpose.msra.mxu0 0.0
    %343 = vmatprep.subr.mxu0 0.0
    %344 = vmatpush1.xpose.msra.mxu0 0.0
    %345 = vmatprep.subr.mxu0 0.0
    %346 = vmatpush1.xpose.msra.mxu0 0.0
    %347 = vmatprep.subr.mxu0 0.0
    %348 = vmatpush1.xpose.msra.mxu0 0.0
    %349 = vmatprep.subr.mxu0 0.0
    %350 = vmatpush1.xpose.msra.mxu0 0.0
    %351 = vmatprep.subr.mxu0 0.0
    %352 = vmatpush1.xpose.msra.mxu0 0.0
    %353 = vmatprep.subr.mxu0 0.0
    %354 = vmatpush1.xpose.msra.mxu0 0.0
    %355 = vmatprep.subr.mxu0 0.0
    %356 = vmatpush1.xpose.msra.mxu0 0.0
    %357 = vmatprep.subr.mxu0 0.0
    %358 = vmatpush1.xpose.msra.mxu0 0.0
    %359 = vmatprep.subr.mxu0 0.0
    %360 = vmatpush1.xpose.msra.mxu0 0.0
    %361 = vmatprep.subr.mxu0 0.0
    %362 = vmatpush1.xpose.msra.mxu0 0.0
    %363 = vmatprep.subr.mxu0 0.0
    %364 = vmatpush1.xpose.msra.mxu0 0.0
    %365 = vmatprep.subr.mxu0 0.0
    %366 = vmatpush1.xpose.msra.mxu0 0.0
    %367 = vmatprep.subr.mxu0 0.0
    %368 = vmatpush1.xpose.msra.mxu0 0.0
    %369 = vmatprep.subr.mxu0 0.0
    %370 = vmatpush1.xpose.msra.mxu0 0.0
    %371 = vmatprep.subr.mxu0 0.0
    %372 = vmatpush1.xpose.msra.mxu0 0.0
    %373 = vmatprep.subr.mxu0 0.0
    %374 = vmatpush1.xpose.msra.mxu0 0.0
    %375 = vmatprep.subr.mxu0 0.0
    %376 = vmatpush1.xpose.msra.mxu0 0.0
    %377 = vmatprep.subr.mxu0 0.0
    %378 = vmatpush1.xpose.msra.mxu0 0.0
    %379 = vmatprep.subr.mxu0 0.0
    %380 = vmatpush1.xpose.msra.mxu0 0.0
    %381 = vmatprep.subr.mxu0 0.0
    %382 = vmatpush1.xpose.msra.mxu0 0.0
    %383 = vmatprep.subr.mxu0 0.0
    %384 = vmatpush1.xpose.msra.mxu0 0.0
    %385 = vmatprep.subr.mxu0 0.0
    %386 = vmatpush1.xpose.msra.mxu0 0.0
    %387 = vmatprep.subr.mxu0 0.0
    %388 = vmatpush1.xpose.msra.mxu0 0.0
    %389 = vmatprep.subr.mxu0 0.0
    %390 = vmatpush1.xpose.msra.mxu0 0.0
    %391 = vmatprep.mubr.f32.mxu0 0.0
    %392 = vmatmul.mubr.f32.gmra.mrb[0].mxu0 %v323
    %v393 = vpop.f32.mrb[0].mxu0
    %v394 = vadd.f32 0.0, %v393
    %v395 = vpop.f32.mrb[0].mxu0
    %396 = vdwg.mxu0
    %397 = vrot.lane.b32.xlu0 %v159, 96
    %v398 = vpop.permute.xlu0 %397
    %v399 = vsel %vm170, %v159, 0
    %v401 = vsel %vm170, %v398, 0
    %403 = vmatprep.subr.mxu0 0.0
    %404 = vmatpush1.xpose.msra.mxu0 %v401
    %405 = vmatprep.subr.mxu0 0.0
    %406 = vmatpush1.xpose.msra.mxu0 0.0
    %407 = vmatprep.subr.mxu0 0.0
    %408 = vmatpush1.xpose.msra.mxu0 0.0
    %409 = vmatprep.subr.mxu0 0.0
    %410 = vmatpush1.xpose.msra.mxu0 0.0
    %411 = vmatprep.subr.mxu0 0.0
    %412 = vmatpush1.xpose.msra.mxu0 0.0
    %413 = vmatprep.subr.mxu0 0.0
    %414 = vmatpush1.xpose.msra.mxu0 0.0
    %415 = vmatprep.subr.mxu0 0.0
    %416 = vmatpush1.xpose.msra.mxu0 0.0
    %417 = vmatprep.subr.mxu0 0.0
    %418 = vmatpush1.xpose.msra.mxu0 0.0
    %419 = vmatprep.subr.mxu0 0.0
    %420 = vmatpush1.xpose.msra.mxu0 0.0
    %421 = vmatprep.subr.mxu0 0.0
    %422 = vmatpush1.xpose.msra.mxu0 0.0
    %423 = vmatprep.subr.mxu0 0.0
    %424 = vmatpush1.xpose.msra.mxu0 0.0
    %425 = vmatprep.subr.mxu0 0.0
    %426 = vmatpush1.xpose.msra.mxu0 0.0
    %427 = vmatprep.subr.mxu0 0.0
    %428 = vmatpush1.xpose.msra.mxu0 0.0
    %429 = vmatprep.subr.mxu0 0.0
    %430 = vmatpush1.xpose.msra.mxu0 0.0
    %431 = vmatprep.subr.mxu0 0.0
    %432 = vmatpush1.xpose.msra.mxu0 0.0
    %433 = vmatprep.subr.mxu0 0.0
    %434 = vmatpush1.xpose.msra.mxu0 0.0
    %435 = vmatprep.subr.mxu0 0.0
    %436 = vmatpush1.xpose.msra.mxu0 0.0
    %437 = vmatprep.subr.mxu0 0.0
    %438 = vmatpush1.xpose.msra.mxu0 0.0
    %439 = vmatprep.subr.mxu0 0.0
    %440 = vmatpush1.xpose.msra.mxu0 0.0
    %441 = vmatprep.subr.mxu0 0.0
    %442 = vmatpush1.xpose.msra.mxu0 0.0
    %443 = vmatprep.subr.mxu0 0.0
    %444 = vmatpush1.xpose.msra.mxu0 0.0
    %445 = vmatprep.subr.mxu0 0.0
    %446 = vmatpush1.xpose.msra.mxu0 0.0
    %447 = vmatprep.subr.mxu0 0.0
    %448 = vmatpush1.xpose.msra.mxu0 0.0
    %449 = vmatprep.subr.mxu0 0.0
    %450 = vmatpush1.xpose.msra.mxu0 0.0
    %451 = vmatprep.subr.mxu0 0.0
    %452 = vmatpush1.xpose.msra.mxu0 0.0
    %453 = vmatprep.subr.mxu0 0.0
    %454 = vmatpush1.xpose.msra.mxu0 0.0
    %455 = vmatprep.subr.mxu0 0.0
    %456 = vmatpush1.xpose.msra.mxu0 0.0
    %457 = vmatprep.subr.mxu0 0.0
    %458 = vmatpush1.xpose.msra.mxu0 0.0
    %459 = vmatprep.subr.mxu0 0.0
    %460 = vmatpush1.xpose.msra.mxu0 0.0
    %461 = vmatprep.subr.mxu0 0.0
    %462 = vmatpush1.xpose.msra.mxu0 0.0
    %463 = vmatprep.subr.mxu0 0.0
    %464 = vmatpush1.xpose.msra.mxu0 0.0
    %465 = vmatprep.subr.mxu0 0.0
    %466 = vmatpush1.xpose.msra.mxu0 0.0
    %467 = vmatprep.mubr.f32.mxu0 0.0
    %468 = vmatmul.mubr.f32.gmra.mrb[0].mxu0 %v399
    %v469 = vpop.f32.mrb[0].mxu0
    %v470 = vadd.f32 0.0, %v469
    %v471 = vpop.f32.mrb[0].mxu0
    %472 = vdwg.mxu0
    %473 = vrot.lane.b32.xlu0 %v161, 96
    %v474 = vpop.permute.xlu0 %473
    %v475 = vsel %vm170, %v161, 0
    %v477 = vsel %vm170, %v474, 0
    %479 = vmatprep.subr.mxu0 0.0
    %480 = vmatpush1.xpose.msra.mxu0 %v477
    %481 = vmatprep.subr.mxu0 0.0
    %482 = vmatpush1.xpose.msra.mxu0 0.0
    %483 = vmatprep.subr.mxu0 0.0
    %484 = vmatpush1.xpose.msra.mxu0 0.0
    %485 = vmatprep.subr.mxu0 0.0
    %486 = vmatpush1.xpose.msra.mxu0 0.0
    %487 = vmatprep.subr.mxu0 0.0
    %488 = vmatpush1.xpose.msra.mxu0 0.0
    %489 = vmatprep.subr.mxu0 0.0
    %490 = vmatpush1.xpose.msra.mxu0 0.0
    %491 = vmatprep.subr.mxu0 0.0
    %492 = vmatpush1.xpose.msra.mxu0 0.0
    %493 = vmatprep.subr.mxu0 0.0
    %494 = vmatpush1.xpose.msra.mxu0 0.0
    %495 = vmatprep.subr.mxu0 0.0
    %496 = vmatpush1.xpose.msra.mxu0 0.0
    %497 = vmatprep.subr.mxu0 0.0
    %498 = vmatpush1.xpose.msra.mxu0 0.0
    %499 = vmatprep.subr.mxu0 0.0
    %500 = vmatpush1.xpose.msra.mxu0 0.0
    %501 = vmatprep.subr.mxu0 0.0
    %502 = vmatpush1.xpose.msra.mxu0 0.0
    %503 = vmatprep.subr.mxu0 0.0
    %504 = vmatpush1.xpose.msra.mxu0 0.0
    %505 = vmatprep.subr.mxu0 0.0
    %506 = vmatpush1.xpose.msra.mxu0 0.0
    %507 = vmatprep.subr.mxu0 0.0
    %508 = vmatpush1.xpose.msra.mxu0 0.0
    %509 = vmatprep.subr.mxu0 0.0
    %510 = vmatpush1.xpose.msra.mxu0 0.0
    %511 = vmatprep.subr.mxu0 0.0
    %512 = vmatpush1.xpose.msra.mxu0 0.0
    %513 = vmatprep.subr.mxu0 0.0
    %514 = vmatpush1.xpose.msra.mxu0 0.0
    %515 = vmatprep.subr.mxu0 0.0
    %516 = vmatpush1.xpose.msra.mxu0 0.0
    %517 = vmatprep.subr.mxu0 0.0
    %518 = vmatpush1.xpose.msra.mxu0 0.0
    %519 = vmatprep.subr.mxu0 0.0
    %520 = vmatpush1.xpose.msra.mxu0 0.0
    %521 = vmatprep.subr.mxu0 0.0
    %522 = vmatpush1.xpose.msra.mxu0 0.0
    %523 = vmatprep.subr.mxu0 0.0
    %524 = vmatpush1.xpose.msra.mxu0 0.0
    %525 = vmatprep.subr.mxu0 0.0
    %526 = vmatpush1.xpose.msra.mxu0 0.0
    %527 = vmatprep.subr.mxu0 0.0
    %528 = vmatpush1.xpose.msra.mxu0 0.0
    %529 = vmatprep.subr.mxu0 0.0
    %530 = vmatpush1.xpose.msra.mxu0 0.0
    %531 = vmatprep.subr.mxu0 0.0
    %532 = vmatpush1.xpose.msra.mxu0 0.0
    %533 = vmatprep.subr.mxu0 0.0
    %534 = vmatpush1.xpose.msra.mxu0 0.0
    %535 = vmatprep.subr.mxu0 0.0
    %536 = vmatpush1.xpose.msra.mxu0 0.0
    %537 = vmatprep.subr.mxu0 0.0
    %538 = vmatpush1.xpose.msra.mxu0 0.0
    %539 = vmatprep.subr.mxu0 0.0
    %540 = vmatpush1.xpose.msra.mxu0 0.0
    %541 = vmatprep.subr.mxu0 0.0
    %542 = vmatpush1.xpose.msra.mxu0 0.0
    %543 = vmatprep.mubr.f32.mxu0 0.0
    %544 = vmatmul.mubr.f32.gmra.mrb[0].mxu0 %v475
    %v545 = vpop.f32.mrb[0].mxu0
    %v546 = vadd.f32 0.0, %v545
    %v547 = vpop.f32.mrb[0].mxu0
    %548 = vdwg.mxu0
    %549 = vrot.lane.b32.xlu0 %v163, 96
    %v550 = vpop.permute.xlu0 %549
    %v551 = vsel %vm170, %v163, 0
    %v553 = vsel %vm170, %v550, 0
    %555 = vmatprep.subr.mxu0 0.0
    %556 = vmatpush1.xpose.msra.mxu0 %v553
    %557 = vmatprep.subr.mxu0 0.0
    %558 = vmatpush1.xpose.msra.mxu0 0.0
    %559 = vmatprep.subr.mxu0 0.0
    %560 = vmatpush1.xpose.msra.mxu0 0.0
    %561 = vmatprep.subr.mxu0 0.0
    %562 = vmatpush1.xpose.msra.mxu0 0.0
    %563 = vmatprep.subr.mxu0 0.0
    %564 = vmatpush1.xpose.msra.mxu0 0.0
    %565 = vmatprep.subr.mxu0 0.0
    %566 = vmatpush1.xpose.msra.mxu0 0.0
    %567 = vmatprep.subr.mxu0 0.0
    %568 = vmatpush1.xpose.msra.mxu0 0.0
    %569 = vmatprep.subr.mxu0 0.0
    %570 = vmatpush1.xpose.msra.mxu0 0.0
    %571 = vmatprep.subr.mxu0 0.0
    %572 = vmatpush1.xpose.msra.mxu0 0.0
    %573 = vmatprep.subr.mxu0 0.0
    %574 = vmatpush1.xpose.msra.mxu0 0.0
    %575 = vmatprep.subr.mxu0 0.0
    %576 = vmatpush1.xpose.msra.mxu0 0.0
    %577 = vmatprep.subr.mxu0 0.0
    %578 = vmatpush1.xpose.msra.mxu0 0.0
    %579 = vmatprep.subr.mxu0 0.0
    %580 = vmatpush1.xpose.msra.mxu0 0.0
    %581 = vmatprep.subr.mxu0 0.0
    %582 = vmatpush1.xpose.msra.mxu0 0.0
    %583 = vmatprep.subr.mxu0 0.0
    %584 = vmatpush1.xpose.msra.mxu0 0.0
    %585 = vmatprep.subr.mxu0 0.0
    %586 = vmatpush1.xpose.msra.mxu0 0.0
    %587 = vmatprep.subr.mxu0 0.0
    %588 = vmatpush1.xpose.msra.mxu0 0.0
    %589 = vmatprep.subr.mxu0 0.0
    %590 = vmatpush1.xpose.msra.mxu0 0.0
    %591 = vmatprep.subr.mxu0 0.0
    %592 = vmatpush1.xpose.msra.mxu0 0.0
    %593 = vmatprep.subr.mxu0 0.0
    %594 = vmatpush1.xpose.msra.mxu0 0.0
    %595 = vmatprep.subr.mxu0 0.0
    %596 = vmatpush1.xpose.msra.mxu0 0.0
    %597 = vmatprep.subr.mxu0 0.0
    %598 = vmatpush1.xpose.msra.mxu0 0.0
    %599 = vmatprep.subr.mxu0 0.0
    %600 = vmatpush1.xpose.msra.mxu0 0.0
    %601 = vmatprep.subr.mxu0 0.0
    %602 = vmatpush1.xpose.msra.mxu0 0.0
    %603 = vmatprep.subr.mxu0 0.0
    %604 = vmatpush1.xpose.msra.mxu0 0.0
    %605 = vmatprep.subr.mxu0 0.0
    %606 = vmatpush1.xpose.msra.mxu0 0.0
    %607 = vmatprep.subr.mxu0 0.0
    %608 = vmatpush1.xpose.msra.mxu0 0.0
    %609 = vmatprep.subr.mxu0 0.0
    %610 = vmatpush1.xpose.msra.mxu0 0.0
    %611 = vmatprep.subr.mxu0 0.0
    %612 = vmatpush1.xpose.msra.mxu0 0.0
    %613 = vmatprep.subr.mxu0 0.0
    %614 = vmatpush1.xpose.msra.mxu0 0.0
    %615 = vmatprep.subr.mxu0 0.0
    %616 = vmatpush1.xpose.msra.mxu0 0.0
    %617 = vmatprep.subr.mxu0 0.0
    %618 = vmatpush1.xpose.msra.mxu0 0.0
    %619 = vmatprep.mubr.f32.mxu0 0.0
    %620 = vmatmul.mubr.f32.gmra.mrb[0].mxu0 %v551
    %v621 = vpop.f32.mrb[0].mxu0
    %v622 = vadd.f32 0.0, %v621
    %v623 = vpop.f32.mrb[0].mxu0
    %624 = vdwg.mxu0
    %625 = vrot.lane.b32.xlu0 %v165, 96
    %v626 = vpop.permute.xlu0 %625
    %v627 = vsel %vm170, %v165, 0
    %v629 = vsel %vm170, %v626, 0
    %631 = vmatprep.subr.mxu0 0.0
    %632 = vmatpush1.xpose.msra.mxu0 %v629
    %633 = vmatprep.subr.mxu0 0.0
    %634 = vmatpush1.xpose.msra.mxu0 0.0
    %635 = vmatprep.subr.mxu0 0.0
    %636 = vmatpush1.xpose.msra.mxu0 0.0
    %637 = vmatprep.subr.mxu0 0.0
    %638 = vmatpush1.xpose.msra.mxu0 0.0
    %639 = vmatprep.subr.mxu0 0.0
    %640 = vmatpush1.xpose.msra.mxu0 0.0
    %641 = vmatprep.subr.mxu0 0.0
    %642 = vmatpush1.xpose.msra.mxu0 0.0
    %643 = vmatprep.subr.mxu0 0.0
    %644 = vmatpush1.xpose.msra.mxu0 0.0
    %645 = vmatprep.subr.mxu0 0.0
    %646 = vmatpush1.xpose.msra.mxu0 0.0
    %647 = vmatprep.subr.mxu0 0.0
    %648 = vmatpush1.xpose.msra.mxu0 0.0
    %649 = vmatprep.subr.mxu0 0.0
    %650 = vmatpush1.xpose.msra.mxu0 0.0
    %651 = vmatprep.subr.mxu0 0.0
    %652 = vmatpush1.xpose.msra.mxu0 0.0
    %653 = vmatprep.subr.mxu0 0.0
    %654 = vmatpush1.xpose.msra.mxu0 0.0
    %655 = vmatprep.subr.mxu0 0.0
    %656 = vmatpush1.xpose.msra.mxu0 0.0
    %657 = vmatprep.subr.mxu0 0.0
    %658 = vmatpush1.xpose.msra.mxu0 0.0
    %659 = vmatprep.subr.mxu0 0.0
    %660 = vmatpush1.xpose.msra.mxu0 0.0
    %661 = vmatprep.subr.mxu0 0.0
    %662 = vmatpush1.xpose.msra.mxu0 0.0
    %663 = vmatprep.subr.mxu0 0.0
    %664 = vmatpush1.xpose.msra.mxu0 0.0
    %665 = vmatprep.subr.mxu0 0.0
    %666 = vmatpush1.xpose.msra.mxu0 0.0
    %667 = vmatprep.subr.mxu0 0.0
    %668 = vmatpush1.xpose.msra.mxu0 0.0
    %669 = vmatprep.subr.mxu0 0.0
    %670 = vmatpush1.xpose.msra.mxu0 0.0
    %671 = vmatprep.subr.mxu0 0.0
    %672 = vmatpush1.xpose.msra.mxu0 0.0
    %673 = vmatprep.subr.mxu0 0.0
    %674 = vmatpush1.xpose.msra.mxu0 0.0
    %675 = vmatprep.subr.mxu0 0.0
    %676 = vmatpush1.xpose.msra.mxu0 0.0
    %677 = vmatprep.subr.mxu0 0.0
    %678 = vmatpush1.xpose.msra.mxu0 0.0
    %679 = vmatprep.subr.mxu0 0.0
    %680 = vmatpush1.xpose.msra.mxu0 0.0
    %681 = vmatprep.subr.mxu0 0.0
    %682 = vmatpush1.xpose.msra.mxu0 0.0
    %683 = vmatprep.subr.mxu0 0.0
    %684 = vmatpush1.xpose.msra.mxu0 0.0
    %685 = vmatprep.subr.mxu0 0.0
    %686 = vmatpush1.xpose.msra.mxu0 0.0
    %687 = vmatprep.subr.mxu0 0.0
    %688 = vmatpush1.xpose.msra.mxu0 0.0
    %689 = vmatprep.subr.mxu0 0.0
    %690 = vmatpush1.xpose.msra.mxu0 0.0
    %691 = vmatprep.subr.mxu0 0.0
    %692 = vmatpush1.xpose.msra.mxu0 0.0
    %693 = vmatprep.subr.mxu0 0.0
    %694 = vmatpush1.xpose.msra.mxu0 0.0
    %695 = vmatprep.mubr.f32.mxu0 0.0
    %696 = vmatmul.mubr.f32.gmra.mrb[0].mxu0 %v627
    %v697 = vpop.f32.mrb[0].mxu0
    %v698 = vadd.f32 0.0, %v697
    %v699 = vpop.f32.mrb[0].mxu0
    %700 = vdwg.mxu0
    %701 = vrot.lane.b32.xlu0 %v167, 96
    %v702 = vpop.permute.xlu0 %701
    %v703 = vsel %vm170, %v167, 0
    %v705 = vsel %vm170, %v702, 0
    %707 = vmatprep.subr.mxu0 0.0
    %708 = vmatpush1.xpose.msra.mxu0 %v705
    %709 = vmatprep.subr.mxu0 0.0
    %710 = vmatpush1.xpose.msra.mxu0 0.0
    %711 = vmatprep.subr.mxu0 0.0
    %712 = vmatpush1.xpose.msra.mxu0 0.0
    %713 = vmatprep.subr.mxu0 0.0
    %714 = vmatpush1.xpose.msra.mxu0 0.0
    %715 = vmatprep.subr.mxu0 0.0
    %716 = vmatpush1.xpose.msra.mxu0 0.0
    %717 = vmatprep.subr.mxu0 0.0
    %718 = vmatpush1.xpose.msra.mxu0 0.0
    %719 = vmatprep.subr.mxu0 0.0
    %720 = vmatpush1.xpose.msra.mxu0 0.0
    %721 = vmatprep.subr.mxu0 0.0
    %722 = vmatpush1.xpose.msra.mxu0 0.0
    %723 = vmatprep.subr.mxu0 0.0
    %724 = vmatpush1.xpose.msra.mxu0 0.0
    %725 = vmatprep.subr.mxu0 0.0
    %726 = vmatpush1.xpose.msra.mxu0 0.0
    %727 = vmatprep.subr.mxu0 0.0
    %728 = vmatpush1.xpose.msra.mxu0 0.0
    %729 = vmatprep.subr.mxu0 0.0
    %730 = vmatpush1.xpose.msra.mxu0 0.0
    %731 = vmatprep.subr.mxu0 0.0
    %732 = vmatpush1.xpose.msra.mxu0 0.0
    %733 = vmatprep.subr.mxu0 0.0
    %734 = vmatpush1.xpose.msra.mxu0 0.0
    %735 = vmatprep.subr.mxu0 0.0
    %736 = vmatpush1.xpose.msra.mxu0 0.0
    %737 = vmatprep.subr.mxu0 0.0
    %738 = vmatpush1.xpose.msra.mxu0 0.0
    %739 = vmatprep.subr.mxu0 0.0
    %740 = vmatpush1.xpose.msra.mxu0 0.0
    %741 = vmatprep.subr.mxu0 0.0
    %742 = vmatpush1.xpose.msra.mxu0 0.0
    %743 = vmatprep.subr.mxu0 0.0
    %744 = vmatpush1.xpose.msra.mxu0 0.0
    %745 = vmatprep.subr.mxu0 0.0
    %746 = vmatpush1.xpose.msra.mxu0 0.0
    %747 = vmatprep.subr.mxu0 0.0
    %748 = vmatpush1.xpose.msra.mxu0 0.0
    %749 = vmatprep.subr.mxu0 0.0
    %750 = vmatpush1.xpose.msra.mxu0 0.0
    %751 = vmatprep.subr.mxu0 0.0
    %752 = vmatpush1.xpose.msra.mxu0 0.0
    %753 = vmatprep.subr.mxu0 0.0
    %754 = vmatpush1.xpose.msra.mxu0 0.0
    %755 = vmatprep.subr.mxu0 0.0
    %756 = vmatpush1.xpose.msra.mxu0 0.0
    %757 = vmatprep.subr.mxu0 0.0
    %758 = vmatpush1.xpose.msra.mxu0 0.0
    %759 = vmatprep.subr.mxu0 0.0
    %760 = vmatpush1.xpose.msra.mxu0 0.0
    %761 = vmatprep.subr.mxu0 0.0
    %762 = vmatpush1.xpose.msra.mxu0 0.0
    %763 = vmatprep.subr.mxu0 0.0
    %764 = vmatpush1.xpose.msra.mxu0 0.0
    %765 = vmatprep.subr.mxu0 0.0
    %766 = vmatpush1.xpose.msra.mxu0 0.0
    %767 = vmatprep.subr.mxu0 0.0
    %768 = vmatpush1.xpose.msra.mxu0 0.0
    %769 = vmatprep.subr.mxu0 0.0
    %770 = vmatpush1.xpose.msra.mxu0 0.0
    %771 = vmatprep.mubr.f32.mxu0 0.0
    %772 = vmatmul.mubr.f32.gmra.mrb[0].mxu0 %v703
    %v773 = vpop.f32.mrb[0].mxu0
    %v774 = vadd.f32 0.0, %v773
    %v775 = vpop.f32.mrb[0].mxu0
    %776 = vdwg.mxu0
    %v777 = vsel %vm170, %v242, -inf
    %778 = vmax.xlane.f32.xlu0 %v777
    %v779 = vpop.xlane.xlu0 %778
    %v780 = vsel %vm170, %v318, -inf
    %781 = vmax.xlane.f32.xlu0 %v780
    %v782 = vpop.xlane.xlu0 %781
    %v783 = vsel %vm170, %v394, -inf
    %784 = vmax.xlane.f32.xlu0 %v783
    %v785 = vpop.xlane.xlu0 %784
    %v786 = vsel %vm170, %v470, -inf
    %787 = vmax.xlane.f32.xlu0 %v786
    %v788 = vpop.xlane.xlu0 %787
    %v789 = vsel %vm170, %v546, -inf
    %790 = vmax.xlane.f32.xlu0 %v789
    %v791 = vpop.xlane.xlu0 %790
    %v792 = vsel %vm170, %v622, -inf
    %793 = vmax.xlane.f32.xlu0 %v792
    %v794 = vpop.xlane.xlu0 %793
    %v795 = vsel %vm170, %v698, -inf
    %796 = vmax.xlane.f32.xlu0 %v795
    %v797 = vpop.xlane.xlu0 %796
    %v798 = vsel %vm170, %v774, -inf
    %799 = vmax.xlane.f32.xlu0 %v798
    %v800 = vpop.xlane.xlu0 %799
    %v801 = vsub.f32 %v242, %v779
    %v802 = vsub.f32 %v318, %v782
    %v803 = vsub.f32 %v394, %v785
    %v804 = vsub.f32 %v470, %v788
    %v805 = vsub.f32 %v546, %v791
    %v806 = vsub.f32 %v622, %v794
    %v807 = vsub.f32 %v698, %v797
    %v808 = vsub.f32 %v774, %v800
    %v809 = vmul.f32 %v801, 1.442695
    %v810 = vpow.pop %v809
    %v811 = vmul.f32 %v802, 1.442695
    %v812 = vpow.pop %v811
    %v813 = vmul.f32 %v803, 1.442695
    %v814 = vpow.pop %v813
    %v815 = vmul.f32 %v804, 1.442695
    %v816 = vpow.pop %v815
    %v817 = vmul.f32 %v805, 1.442695
    %v818 = vpow.pop %v817
    %v819 = vmul.f32 %v806, 1.442695
    %v820 = vpow.pop %v819
    %v821 = vmul.f32 %v807, 1.442695
    %v822 = vpow.pop %v821
    %v823 = vmul.f32 %v808, 1.442695
    %v824 = vpow.pop %v823
    %v825 = vsel %vm170, %v810, 0.0
    %826 = vadd.xlane.f32.xlu0 %v825
    %v827 = vpop.xlane.xlu0 %826
    %v828 = vsel %vm170, %v812, 0.0
    %829 = vadd.xlane.f32.xlu0 %v828
    %v830 = vpop.xlane.xlu0 %829
    %v831 = vsel %vm170, %v814, 0.0
    %832 = vadd.xlane.f32.xlu0 %v831
    %v833 = vpop.xlane.xlu0 %832
    %v834 = vsel %vm170, %v816, 0.0
    %835 = vadd.xlane.f32.xlu0 %v834
    %v836 = vpop.xlane.xlu0 %835
    %v837 = vsel %vm170, %v818, 0.0
    %838 = vadd.xlane.f32.xlu0 %v837
    %v839 = vpop.xlane.xlu0 %838
    %v840 = vsel %vm170, %v820, 0.0
    %841 = vadd.xlane.f32.xlu0 %v840
    %v842 = vpop.xlane.xlu0 %841
    %v843 = vsel %vm170, %v822, 0.0
    %844 = vadd.xlane.f32.xlu0 %v843
    %v845 = vpop.xlane.xlu0 %844
    %v846 = vsel %vm170, %v824, 0.0
    %847 = vadd.xlane.f32.xlu0 %v846
    %v848 = vpop.xlane.xlu0 %847
    %v849 = vrcp.pop %v827
    %v850 = vmul.f32 %v810, %v849
    %v851 = vrcp.pop %v830
    %v852 = vmul.f32 %v812, %v851
    %v853 = vrcp.pop %v833
    %v854 = vmul.f32 %v814, %v853
    %v855 = vrcp.pop %v836
    %v856 = vmul.f32 %v816, %v855
    %v857 = vrcp.pop %v839
    %v858 = vmul.f32 %v818, %v857
    %v859 = vrcp.pop %v842
    %v860 = vmul.f32 %v820, %v859
    %v861 = vrcp.pop %v845
    %v862 = vmul.f32 %v822, %v861
    %v863 = vrcp.pop %v848
    %v864 = vmul.f32 %v824, %v863
    %865 = vrot.lane.b32.xlu0 %v146, 64
    %v866 = vpop.permute.xlu0 %865
    %v869 = vsel %vm170, %v850, 0
    %871 = vmatprep.subr.mxu0 0.0
    %872 = vmatpush1.msra.mxu0 %v866
    %873 = vmatprep.subr.mxu0 0.0
    %874 = vmatpush1.msra.mxu0 0.0
    %875 = vmatprep.subr.mxu0 0.0
    %876 = vmatpush1.msra.mxu0 0.0
    %877 = vmatprep.subr.mxu0 0.0
    %878 = vmatpush1.msra.mxu0 0.0
    %879 = vmatprep.subr.mxu0 0.0
    %880 = vmatpush1.msra.mxu0 0.0
    %881 = vmatprep.subr.mxu0 0.0
    %882 = vmatpush1.msra.mxu0 0.0
    %883 = vmatprep.subr.mxu0 0.0
    %884 = vmatpush1.msra.mxu0 0.0
    %885 = vmatprep.subr.mxu0 0.0
    %886 = vmatpush1.msra.mxu0 0.0
    %887 = vmatprep.subr.mxu0 0.0
    %888 = vmatpush1.msra.mxu0 0.0
    %889 = vmatprep.subr.mxu0 0.0
    %890 = vmatpush1.msra.mxu0 0.0
    %891 = vmatprep.subr.mxu0 0.0
    %892 = vmatpush1.msra.mxu0 0.0
    %893 = vmatprep.subr.mxu0 0.0
    %894 = vmatpush1.msra.mxu0 0.0
    %895 = vmatprep.subr.mxu0 0.0
    %896 = vmatpush1.msra.mxu0 0.0
    %897 = vmatprep.subr.mxu0 0.0
    %898 = vmatpush1.msra.mxu0 0.0
    %899 = vmatprep.subr.mxu0 0.0
    %900 = vmatpush1.msra.mxu0 0.0
    %901 = vmatprep.subr.mxu0 0.0
    %902 = vmatpush1.msra.mxu0 0.0
    %903 = vmatprep.subr.mxu0 0.0
    %904 = vmatpush1.msra.mxu0 0.0
    %905 = vmatprep.subr.mxu0 0.0
    %906 = vmatpush1.msra.mxu0 0.0
    %907 = vmatprep.subr.mxu0 0.0
    %908 = vmatpush1.msra.mxu0 0.0
    %909 = vmatprep.subr.mxu0 0.0
    %910 = vmatpush1.msra.mxu0 0.0
    %911 = vmatprep.subr.mxu0 0.0
    %912 = vmatpush1.msra.mxu0 0.0
    %913 = vmatprep.subr.mxu0 0.0
    %914 = vmatpush1.msra.mxu0 0.0
    %915 = vmatprep.subr.mxu0 0.0
    %916 = vmatpush1.msra.mxu0 0.0
    %917 = vmatprep.subr.mxu0 0.0
    %918 = vmatpush1.msra.mxu0 0.0
    %919 = vmatprep.subr.mxu0 0.0
    %920 = vmatpush1.msra.mxu0 0.0
    %921 = vmatprep.subr.mxu0 0.0
    %922 = vmatpush1.msra.mxu0 0.0
    %923 = vmatprep.subr.mxu0 0.0
    %924 = vmatpush1.msra.mxu0 0.0
    %925 = vmatprep.subr.mxu0 0.0
    %926 = vmatpush1.msra.mxu0 0.0
    %927 = vmatprep.subr.mxu0 0.0
    %928 = vmatpush1.msra.mxu0 0.0
    %929 = vmatprep.subr.mxu0 0.0
    %930 = vmatpush1.msra.mxu0 0.0
    %931 = vmatprep.subr.mxu0 0.0
    %932 = vmatpush1.msra.mxu0 0.0
    %933 = vmatprep.subr.mxu0 0.0
    %934 = vmatpush1.msra.mxu0 0.0
    %935 = vmatprep.mubr.f32.mxu0 0.0
    %936 = vmatmul.mubr.f32.gmra.mrb[0].mxu0 %v869
    %v937 = vpop.f32.mrb[0].mxu0
    %v938 = vadd.f32 0.0, %v937
    %v939 = vpop.f32.mrb[0].mxu0
    %940 = vdwg.mxu0
    %941 = vrot.lane.b32.xlu0 %v151, 64
    %v942 = vpop.permute.xlu0 %941
    %v945 = vsel %vm170, %v852, 0
    %947 = vmatprep.subr.mxu0 0.0
    %948 = vmatpush1.msra.mxu0 %v942
    %949 = vmatprep.subr.mxu0 0.0
    %950 = vmatpush1.msra.mxu0 0.0
    %951 = vmatprep.subr.mxu0 0.0
    %952 = vmatpush1.msra.mxu0 0.0
    %953 = vmatprep.subr.mxu0 0.0
    %954 = vmatpush1.msra.mxu0 0.0
    %955 = vmatprep.subr.mxu0 0.0
    %956 = vmatpush1.msra.mxu0 0.0
    %957 = vmatprep.subr.mxu0 0.0
    %958 = vmatpush1.msra.mxu0 0.0
    %959 = vmatprep.subr.mxu0 0.0
    %960 = vmatpush1.msra.mxu0 0.0
    %961 = vmatprep.subr.mxu0 0.0
    %962 = vmatpush1.msra.mxu0 0.0
    %963 = vmatprep.subr.mxu0 0.0
    %964 = vmatpush1.msra.mxu0 0.0
    %965 = vmatprep.subr.mxu0 0.0
    %966 = vmatpush1.msra.mxu0 0.0
    %967 = vmatprep.subr.mxu0 0.0
    %968 = vmatpush1.msra.mxu0 0.0
    %969 = vmatprep.subr.mxu0 0.0
    %970 = vmatpush1.msra.mxu0 0.0
    %971 = vmatprep.subr.mxu0 0.0
    %972 = vmatpush1.msra.mxu0 0.0
    %973 = vmatprep.subr.mxu0 0.0
    %974 = vmatpush1.msra.mxu0 0.0
    %975 = vmatprep.subr.mxu0 0.0
    %976 = vmatpush1.msra.mxu0 0.0
    %977 = vmatprep.subr.mxu0 0.0
    %978 = vmatpush1.msra.mxu0 0.0
    %979 = vmatprep.subr.mxu0 0.0
    %980 = vmatpush1.msra.mxu0 0.0
    %981 = vmatprep.subr.mxu0 0.0
    %982 = vmatpush1.msra.mxu0 0.0
    %983 = vmatprep.subr.mxu0 0.0
    %984 = vmatpush1.msra.mxu0 0.0
    %985 = vmatprep.subr.mxu0 0.0
    %986 = vmatpush1.msra.mxu0 0.0
    %987 = vmatprep.subr.mxu0 0.0
    %988 = vmatpush1.msra.mxu0 0.0
    %989 = vmatprep.subr.mxu0 0.0
    %990 = vmatpush1.msra.mxu0 0.0
    %991 = vmatprep.subr.mxu0 0.0
    %992 = vmatpush1.msra.mxu0 0.0
    %993 = vmatprep.subr.mxu0 0.0
    %994 = vmatpush1.msra.mxu0 0.0
    %995 = vmatprep.subr.mxu0 0.0
    %996 = vmatpush1.msra.mxu0 0.0
    %997 = vmatprep.subr.mxu0 0.0
    %998 = vmatpush1.msra.mxu0 0.0
    %999 = vmatprep.subr.mxu0 0.0
    %1000 = vmatpush1.msra.mxu0 0.0
    %1001 = vmatprep.subr.mxu0 0.0
    %1002 = vmatpush1.msra.mxu0 0.0
    %1003 = vmatprep.subr.mxu0 0.0
    %1004 = vmatpush1.msra.mxu0 0.0
    %1005 = vmatprep.subr.mxu0 0.0
    %1006 = vmatpush1.msra.mxu0 0.0
    %1007 = vmatprep.subr.mxu0 0.0
    %1008 = vmatpush1.msra.mxu0 0.0
    %1009 = vmatprep.subr.mxu0 0.0
    %1010 = vmatpush1.msra.mxu0 0.0
    %1011 = vmatprep.mubr.f32.mxu0 0.0
    %1012 = vmatmul.mubr.f32.gmra.mrb[0].mxu0 %v945
    %v1013 = vpop.f32.mrb[0].mxu0
    %v1014 = vadd.f32 0.0, %v1013
    %v1015 = vpop.f32.mrb[0].mxu0
    %1016 = vdwg.mxu0
    %1017 = vrot.lane.b32.xlu0 %v157, 64
    %v1018 = vpop.permute.xlu0 %1017
    %v1021 = vsel %vm170, %v854, 0
    %1023 = vmatprep.subr.mxu0 0.0
    %1024 = vmatpush1.msra.mxu0 %v1018
    %1025 = vmatprep.subr.mxu0 0.0
    %1026 = vmatpush1.msra.mxu0 0.0
    %1027 = vmatprep.subr.mxu0 0.0
    %1028 = vmatpush1.msra.mxu0 0.0
    %1029 = vmatprep.subr.mxu0 0.0
    %1030 = vmatpush1.msra.mxu0 0.0
    %1031 = vmatprep.subr.mxu0 0.0
    %1032 = vmatpush1.msra.mxu0 0.0
    %1033 = vmatprep.subr.mxu0 0.0
    %1034 = vmatpush1.msra.mxu0 0.0
    %1035 = vmatprep.subr.mxu0 0.0
    %1036 = vmatpush1.msra.mxu0 0.0
    %1037 = vmatprep.subr.mxu0 0.0
    %1038 = vmatpush1.msra.mxu0 0.0
    %1039 = vmatprep.subr.mxu0 0.0
    %1040 = vmatpush1.msra.mxu0 0.0
    %1041 = vmatprep.subr.mxu0 0.0
    %1042 = vmatpush1.msra.mxu0 0.0
    %1043 = vmatprep.subr.mxu0 0.0
    %1044 = vmatpush1.msra.mxu0 0.0
    %1045 = vmatprep.subr.mxu0 0.0
    %1046 = vmatpush1.msra.mxu0 0.0
    %1047 = vmatprep.subr.mxu0 0.0
    %1048 = vmatpush1.msra.mxu0 0.0
    %1049 = vmatprep.subr.mxu0 0.0
    %1050 = vmatpush1.msra.mxu0 0.0
    %1051 = vmatprep.subr.mxu0 0.0
    %1052 = vmatpush1.msra.mxu0 0.0
    %1053 = vmatprep.subr.mxu0 0.0
    %1054 = vmatpush1.msra.mxu0 0.0
    %1055 = vmatprep.subr.mxu0 0.0
    %1056 = vmatpush1.msra.mxu0 0.0
    %1057 = vmatprep.subr.mxu0 0.0
    %1058 = vmatpush1.msra.mxu0 0.0
    %1059 = vmatprep.subr.mxu0 0.0
    %1060 = vmatpush1.msra.mxu0 0.0
    %1061 = vmatprep.subr.mxu0 0.0
    %1062 = vmatpush1.msra.mxu0 0.0
    %1063 = vmatprep.subr.mxu0 0.0
    %1064 = vmatpush1.msra.mxu0 0.0
    %1065 = vmatprep.subr.mxu0 0.0
    %1066 = vmatpush1.msra.mxu0 0.0
    %1067 = vmatprep.subr.mxu0 0.0
    %1068 = vmatpush1.msra.mxu0 0.0
    %1069 = vmatprep.subr.mxu0 0.0
    %1070 = vmatpush1.msra.mxu0 0.0
    %1071 = vmatprep.subr.mxu0 0.0
    %1072 = vmatpush1.msra.mxu0 0.0
    %1073 = vmatprep.subr.mxu0 0.0
    %1074 = vmatpush1.msra.mxu0 0.0
    %1075 = vmatprep.subr.mxu0 0.0
    %1076 = vmatpush1.msra.mxu0 0.0
    %1077 = vmatprep.subr.mxu0 0.0
    %1078 = vmatpush1.msra.mxu0 0.0
    %1079 = vmatprep.subr.mxu0 0.0
    %1080 = vmatpush1.msra.mxu0 0.0
    %1081 = vmatprep.subr.mxu0 0.0
    %1082 = vmatpush1.msra.mxu0 0.0
    %1083 = vmatprep.subr.mxu0 0.0
    %1084 = vmatpush1.msra.mxu0 0.0
    %1085 = vmatprep.subr.mxu0 0.0
    %1086 = vmatpush1.msra.mxu0 0.0
    %1087 = vmatprep.mubr.f32.mxu0 0.0
    %1088 = vmatmul.mubr.f32.gmra.mrb[0].mxu0 %v1021
    %v1089 = vpop.f32.mrb[0].mxu0
    %v1090 = vadd.f32 0.0, %v1089
    %v1091 = vpop.f32.mrb[0].mxu0
    %1092 = vdwg.mxu0
    %1093 = vrot.lane.b32.xlu0 %v159, 64
    %v1094 = vpop.permute.xlu0 %1093
    %v1097 = vsel %vm170, %v856, 0
    %1099 = vmatprep.subr.mxu0 0.0
    %1100 = vmatpush1.msra.mxu0 %v1094
    %1101 = vmatprep.subr.mxu0 0.0
    %1102 = vmatpush1.msra.mxu0 0.0
    %1103 = vmatprep.subr.mxu0 0.0
    %1104 = vmatpush1.msra.mxu0 0.0
    %1105 = vmatprep.subr.mxu0 0.0
    %1106 = vmatpush1.msra.mxu0 0.0
    %1107 = vmatprep.subr.mxu0 0.0
    %1108 = vmatpush1.msra.mxu0 0.0
    %1109 = vmatprep.subr.mxu0 0.0
    %1110 = vmatpush1.msra.mxu0 0.0
    %1111 = vmatprep.subr.mxu0 0.0
    %1112 = vmatpush1.msra.mxu0 0.0
    %1113 = vmatprep.subr.mxu0 0.0
    %1114 = vmatpush1.msra.mxu0 0.0
    %1115 = vmatprep.subr.mxu0 0.0
    %1116 = vmatpush1.msra.mxu0 0.0
    %1117 = vmatprep.subr.mxu0 0.0
    %1118 = vmatpush1.msra.mxu0 0.0
    %1119 = vmatprep.subr.mxu0 0.0
    %1120 = vmatpush1.msra.mxu0 0.0
    %1121 = vmatprep.subr.mxu0 0.0
    %1122 = vmatpush1.msra.mxu0 0.0
    %1123 = vmatprep.subr.mxu0 0.0
    %1124 = vmatpush1.msra.mxu0 0.0
    %1125 = vmatprep.subr.mxu0 0.0
    %1126 = vmatpush1.msra.mxu0 0.0
    %1127 = vmatprep.subr.mxu0 0.0
    %1128 = vmatpush1.msra.mxu0 0.0
    %1129 = vmatprep.subr.mxu0 0.0
    %1130 = vmatpush1.msra.mxu0 0.0
    %1131 = vmatprep.subr.mxu0 0.0
    %1132 = vmatpush1.msra.mxu0 0.0
    %1133 = vmatprep.subr.mxu0 0.0
    %1134 = vmatpush1.msra.mxu0 0.0
    %1135 = vmatprep.subr.mxu0 0.0
    %1136 = vmatpush1.msra.mxu0 0.0
    %1137 = vmatprep.subr.mxu0 0.0
    %1138 = vmatpush1.msra.mxu0 0.0
    %1139 = vmatprep.subr.mxu0 0.0
    %1140 = vmatpush1.msra.mxu0 0.0
    %1141 = vmatprep.subr.mxu0 0.0
    %1142 = vmatpush1.msra.mxu0 0.0
    %1143 = vmatprep.subr.mxu0 0.0
    %1144 = vmatpush1.msra.mxu0 0.0
    %1145 = vmatprep.subr.mxu0 0.0
    %1146 = vmatpush1.msra.mxu0 0.0
    %1147 = vmatprep.subr.mxu0 0.0
    %1148 = vmatpush1.msra.mxu0 0.0
    %1149 = vmatprep.subr.mxu0 0.0
    %1150 = vmatpush1.msra.mxu0 0.0
    %1151 = vmatprep.subr.mxu0 0.0
    %1152 = vmatpush1.msra.mxu0 0.0
    %1153 = vmatprep.subr.mxu0 0.0
    %1154 = vmatpush1.msra.mxu0 0.0
    %1155 = vmatprep.subr.mxu0 0.0
    %1156 = vmatpush1.msra.mxu0 0.0
    %1157 = vmatprep.subr.mxu0 0.0
    %1158 = vmatpush1.msra.mxu0 0.0
    %1159 = vmatprep.subr.mxu0 0.0
    %1160 = vmatpush1.msra.mxu0 0.0
    %1161 = vmatprep.subr.mxu0 0.0
    %1162 = vmatpush1.msra.mxu0 0.0
    %1163 = vmatprep.mubr.f32.mxu0 0.0
    %1164 = vmatmul.mubr.f32.gmra.mrb[0].mxu0 %v1097
    %v1165 = vpop.f32.mrb[0].mxu0
    %v1166 = vadd.f32 0.0, %v1165
    %v1167 = vpop.f32.mrb[0].mxu0
    %1168 = vdwg.mxu0
    %1169 = vrot.lane.b32.xlu0 %v161, 64
    %v1170 = vpop.permute.xlu0 %1169
    %v1173 = vsel %vm170, %v858, 0
    %1175 = vmatprep.subr.mxu0 0.0
    %1176 = vmatpush1.msra.mxu0 %v1170
    %1177 = vmatprep.subr.mxu0 0.0
    %1178 = vmatpush1.msra.mxu0 0.0
    %1179 = vmatprep.subr.mxu0 0.0
    %1180 = vmatpush1.msra.mxu0 0.0
    %1181 = vmatprep.subr.mxu0 0.0
    %1182 = vmatpush1.msra.mxu0 0.0
    %1183 = vmatprep.subr.mxu0 0.0
    %1184 = vmatpush1.msra.mxu0 0.0
    %1185 = vmatprep.subr.mxu0 0.0
    %1186 = vmatpush1.msra.mxu0 0.0
    %1187 = vmatprep.subr.mxu0 0.0
    %1188 = vmatpush1.msra.mxu0 0.0
    %1189 = vmatprep.subr.mxu0 0.0
    %1190 = vmatpush1.msra.mxu0 0.0
    %1191 = vmatprep.subr.mxu0 0.0
    %1192 = vmatpush1.msra.mxu0 0.0
    %1193 = vmatprep.subr.mxu0 0.0
    %1194 = vmatpush1.msra.mxu0 0.0
    %1195 = vmatprep.subr.mxu0 0.0
    %1196 = vmatpush1.msra.mxu0 0.0
    %1197 = vmatprep.subr.mxu0 0.0
    %1198 = vmatpush1.msra.mxu0 0.0
    %1199 = vmatprep.subr.mxu0 0.0
    %1200 = vmatpush1.msra.mxu0 0.0
    %1201 = vmatprep.subr.mxu0 0.0
    %1202 = vmatpush1.msra.mxu0 0.0
    %1203 = vmatprep.subr.mxu0 0.0
    %1204 = vmatpush1.msra.mxu0 0.0
    %1205 = vmatprep.subr.mxu0 0.0
    %1206 = vmatpush1.msra.mxu0 0.0
    %1207 = vmatprep.subr.mxu0 0.0
    %1208 = vmatpush1.msra.mxu0 0.0
    %1209 = vmatprep.subr.mxu0 0.0
    %1210 = vmatpush1.msra.mxu0 0.0
    %1211 = vmatprep.subr.mxu0 0.0
    %1212 = vmatpush1.msra.mxu0 0.0
    %1213 = vmatprep.subr.mxu0 0.0
    %1214 = vmatpush1.msra.mxu0 0.0
    %1215 = vmatprep.subr.mxu0 0.0
    %1216 = vmatpush1.msra.mxu0 0.0
    %1217 = vmatprep.subr.mxu0 0.0
    %1218 = vmatpush1.msra.mxu0 0.0
    %1219 = vmatprep.subr.mxu0 0.0
    %1220 = vmatpush1.msra.mxu0 0.0
    %1221 = vmatprep.subr.mxu0 0.0
    %1222 = vmatpush1.msra.mxu0 0.0
    %1223 = vmatprep.subr.mxu0 0.0
    %1224 = vmatpush1.msra.mxu0 0.0
    %1225 = vmatprep.subr.mxu0 0.0
    %1226 = vmatpush1.msra.mxu0 0.0
    %1227 = vmatprep.subr.mxu0 0.0
    %1228 = vmatpush1.msra.mxu0 0.0
    %1229 = vmatprep.subr.mxu0 0.0
    %1230 = vmatpush1.msra.mxu0 0.0
    %1231 = vmatprep.subr.mxu0 0.0
    %1232 = vmatpush1.msra.mxu0 0.0
    %1233 = vmatprep.subr.mxu0 0.0
    %1234 = vmatpush1.msra.mxu0 0.0
    %1235 = vmatprep.subr.mxu0 0.0
    %1236 = vmatpush1.msra.mxu0 0.0
    %1237 = vmatprep.subr.mxu0 0.0
    %1238 = vmatpush1.msra.mxu0 0.0
    %1239 = vmatprep.mubr.f32.mxu0 0.0
    %1240 = vmatmul.mubr.f32.gmra.mrb[0].mxu0 %v1173
    %v1241 = vpop.f32.mrb[0].mxu0
    %v1242 = vadd.f32 0.0, %v1241
    %v1243 = vpop.f32.mrb[0].mxu0
    %1244 = vdwg.mxu0
    %1245 = vrot.lane.b32.xlu0 %v163, 64
    %v1246 = vpop.permute.xlu0 %1245
    %v1249 = vsel %vm170, %v860, 0
    %1251 = vmatprep.subr.mxu0 0.0
    %1252 = vmatpush1.msra.mxu0 %v1246
    %1253 = vmatprep.subr.mxu0 0.0
    %1254 = vmatpush1.msra.mxu0 0.0
    %1255 = vmatprep.subr.mxu0 0.0
    %1256 = vmatpush1.msra.mxu0 0.0
    %1257 = vmatprep.subr.mxu0 0.0
    %1258 = vmatpush1.msra.mxu0 0.0
    %1259 = vmatprep.subr.mxu0 0.0
    %1260 = vmatpush1.msra.mxu0 0.0
    %1261 = vmatprep.subr.mxu0 0.0
    %1262 = vmatpush1.msra.mxu0 0.0
    %1263 = vmatprep.subr.mxu0 0.0
    %1264 = vmatpush1.msra.mxu0 0.0
    %1265 = vmatprep.subr.mxu0 0.0
    %1266 = vmatpush1.msra.mxu0 0.0
    %1267 = vmatprep.subr.mxu0 0.0
    %1268 = vmatpush1.msra.mxu0 0.0
    %1269 = vmatprep.subr.mxu0 0.0
    %1270 = vmatpush1.msra.mxu0 0.0
    %1271 = vmatprep.subr.mxu0 0.0
    %1272 = vmatpush1.msra.mxu0 0.0
    %1273 = vmatprep.subr.mxu0 0.0
    %1274 = vmatpush1.msra.mxu0 0.0
    %1275 = vmatprep.subr.mxu0 0.0
    %1276 = vmatpush1.msra.mxu0 0.0
    %1277 = vmatprep.subr.mxu0 0.0
    %1278 = vmatpush1.msra.mxu0 0.0
    %1279 = vmatprep.subr.mxu0 0.0
    %1280 = vmatpush1.msra.mxu0 0.0
    %1281 = vmatprep.subr.mxu0 0.0
    %1282 = vmatpush1.msra.mxu0 0.0
    %1283 = vmatprep.subr.mxu0 0.0
    %1284 = vmatpush1.msra.mxu0 0.0
    %1285 = vmatprep.subr.mxu0 0.0
    %1286 = vmatpush1.msra.mxu0 0.0
    %1287 = vmatprep.subr.mxu0 0.0
    %1288 = vmatpush1.msra.mxu0 0.0
    %1289 = vmatprep.subr.mxu0 0.0
    %1290 = vmatpush1.msra.mxu0 0.0
    %1291 = vmatprep.subr.mxu0 0.0
    %1292 = vmatpush1.msra.mxu0 0.0
    %1293 = vmatprep.subr.mxu0 0.0
    %1294 = vmatpush1.msra.mxu0 0.0
    %1295 = vmatprep.subr.mxu0 0.0
    %1296 = vmatpush1.msra.mxu0 0.0
    %1297 = vmatprep.subr.mxu0 0.0
    %1298 = vmatpush1.msra.mxu0 0.0
    %1299 = vmatprep.subr.mxu0 0.0
    %1300 = vmatpush1.msra.mxu0 0.0
    %1301 = vmatprep.subr.mxu0 0.0
    %1302 = vmatpush1.msra.mxu0 0.0
    %1303 = vmatprep.subr.mxu0 0.0
    %1304 = vmatpush1.msra.mxu0 0.0
    %1305 = vmatprep.subr.mxu0 0.0
    %1306 = vmatpush1.msra.mxu0 0.0
    %1307 = vmatprep.subr.mxu0 0.0
    %1308 = vmatpush1.msra.mxu0 0.0
    %1309 = vmatprep.subr.mxu0 0.0
    %1310 = vmatpush1.msra.mxu0 0.0
    %1311 = vmatprep.subr.mxu0 0.0
    %1312 = vmatpush1.msra.mxu0 0.0
    %1313 = vmatprep.subr.mxu0 0.0
    %1314 = vmatpush1.msra.mxu0 0.0
    %1315 = vmatprep.mubr.f32.mxu0 0.0
    %1316 = vmatmul.mubr.f32.gmra.mrb[0].mxu0 %v1249
    %v1317 = vpop.f32.mrb[0].mxu0
    %v1318 = vadd.f32 0.0, %v1317
    %v1319 = vpop.f32.mrb[0].mxu0
    %1320 = vdwg.mxu0
    %1321 = vrot.lane.b32.xlu0 %v165, 64
    %v1322 = vpop.permute.xlu0 %1321
    %v1325 = vsel %vm170, %v862, 0
    %1327 = vmatprep.subr.mxu0 0.0
    %1328 = vmatpush1.msra.mxu0 %v1322
    %1329 = vmatprep.subr.mxu0 0.0
    %1330 = vmatpush1.msra.mxu0 0.0
    %1331 = vmatprep.subr.mxu0 0.0
    %1332 = vmatpush1.msra.mxu0 0.0
    %1333 = vmatprep.subr.mxu0 0.0
    %1334 = vmatpush1.msra.mxu0 0.0
    %1335 = vmatprep.subr.mxu0 0.0
    %1336 = vmatpush1.msra.mxu0 0.0
    %1337 = vmatprep.subr.mxu0 0.0
    %1338 = vmatpush1.msra.mxu0 0.0
    %1339 = vmatprep.subr.mxu0 0.0
    %1340 = vmatpush1.msra.mxu0 0.0
    %1341 = vmatprep.subr.mxu0 0.0
    %1342 = vmatpush1.msra.mxu0 0.0
    %1343 = vmatprep.subr.mxu0 0.0
    %1344 = vmatpush1.msra.mxu0 0.0
    %1345 = vmatprep.subr.mxu0 0.0
    %1346 = vmatpush1.msra.mxu0 0.0
    %1347 = vmatprep.subr.mxu0 0.0
    %1348 = vmatpush1.msra.mxu0 0.0
    %1349 = vmatprep.subr.mxu0 0.0
    %1350 = vmatpush1.msra.mxu0 0.0
    %1351 = vmatprep.subr.mxu0 0.0
    %1352 = vmatpush1.msra.mxu0 0.0
    %1353 = vmatprep.subr.mxu0 0.0
    %1354 = vmatpush1.msra.mxu0 0.0
    %1355 = vmatprep.subr.mxu0 0.0
    %1356 = vmatpush1.msra.mxu0 0.0
    %1357 = vmatprep.subr.mxu0 0.0
    %1358 = vmatpush1.msra.mxu0 0.0
    %1359 = vmatprep.subr.mxu0 0.0
    %1360 = vmatpush1.msra.mxu0 0.0
    %1361 = vmatprep.subr.mxu0 0.0
    %1362 = vmatpush1.msra.mxu0 0.0
    %1363 = vmatprep.subr.mxu0 0.0
    %1364 = vmatpush1.msra.mxu0 0.0
    %1365 = vmatprep.subr.mxu0 0.0
    %1366 = vmatpush1.msra.mxu0 0.0
    %1367 = vmatprep.subr.mxu0 0.0
    %1368 = vmatpush1.msra.mxu0 0.0
    %1369 = vmatprep.subr.mxu0 0.0
    %1370 = vmatpush1.msra.mxu0 0.0
    %1371 = vmatprep.subr.mxu0 0.0
    %1372 = vmatpush1.msra.mxu0 0.0
    %1373 = vmatprep.subr.mxu0 0.0
    %1374 = vmatpush1.msra.mxu0 0.0
    %1375 = vmatprep.subr.mxu0 0.0
    %1376 = vmatpush1.msra.mxu0 0.0
    %1377 = vmatprep.subr.mxu0 0.0
    %1378 = vmatpush1.msra.mxu0 0.0
    %1379 = vmatprep.subr.mxu0 0.0
    %1380 = vmatpush1.msra.mxu0 0.0
    %1381 = vmatprep.subr.mxu0 0.0
    %1382 = vmatpush1.msra.mxu0 0.0
    %1383 = vmatprep.subr.mxu0 0.0
    %1384 = vmatpush1.msra.mxu0 0.0
    %1385 = vmatprep.subr.mxu0 0.0
    %1386 = vmatpush1.msra.mxu0 0.0
    %1387 = vmatprep.subr.mxu0 0.0
    %1388 = vmatpush1.msra.mxu0 0.0
    %1389 = vmatprep.subr.mxu0 0.0
    %1390 = vmatpush1.msra.mxu0 0.0
    %1391 = vmatprep.mubr.f32.mxu0 0.0
    %1392 = vmatmul.mubr.f32.gmra.mrb[0].mxu0 %v1325
    %v1393 = vpop.f32.mrb[0].mxu0
    %v1394 = vadd.f32 0.0, %v1393
    %v1395 = vpop.f32.mrb[0].mxu0
    %1396 = vdwg.mxu0
    %1397 = vrot.lane.b32.xlu0 %v167, 64
    %v1398 = vpop.permute.xlu0 %1397
    %v1401 = vsel %vm170, %v864, 0
    %1403 = vmatprep.subr.mxu0 0.0
    %1404 = vmatpush1.msra.mxu0 %v1398
    %1405 = vmatprep.subr.mxu0 0.0
    %1406 = vmatpush1.msra.mxu0 0.0
    %1407 = vmatprep.subr.mxu0 0.0
    %1408 = vmatpush1.msra.mxu0 0.0
    %1409 = vmatprep.subr.mxu0 0.0
    %1410 = vmatpush1.msra.mxu0 0.0
    %1411 = vmatprep.subr.mxu0 0.0
    %1412 = vmatpush1.msra.mxu0 0.0
    %1413 = vmatprep.subr.mxu0 0.0
    %1414 = vmatpush1.msra.mxu0 0.0
    %1415 = vmatprep.subr.mxu0 0.0
    %1416 = vmatpush1.msra.mxu0 0.0
    %1417 = vmatprep.subr.mxu0 0.0
    %1418 = vmatpush1.msra.mxu0 0.0
    %1419 = vmatprep.subr.mxu0 0.0
    %1420 = vmatpush1.msra.mxu0 0.0
    %1421 = vmatprep.subr.mxu0 0.0
    %1422 = vmatpush1.msra.mxu0 0.0
    %1423 = vmatprep.subr.mxu0 0.0
    %1424 = vmatpush1.msra.mxu0 0.0
    %1425 = vmatprep.subr.mxu0 0.0
    %1426 = vmatpush1.msra.mxu0 0.0
    %1427 = vmatprep.subr.mxu0 0.0
    %1428 = vmatpush1.msra.mxu0 0.0
    %1429 = vmatprep.subr.mxu0 0.0
    %1430 = vmatpush1.msra.mxu0 0.0
    %1431 = vmatprep.subr.mxu0 0.0
    %1432 = vmatpush1.msra.mxu0 0.0
    %1433 = vmatprep.subr.mxu0 0.0
    %1434 = vmatpush1.msra.mxu0 0.0
    %1435 = vmatprep.subr.mxu0 0.0
    %1436 = vmatpush1.msra.mxu0 0.0
    %1437 = vmatprep.subr.mxu0 0.0
    %1438 = vmatpush1.msra.mxu0 0.0
    %1439 = vmatprep.subr.mxu0 0.0
    %1440 = vmatpush1.msra.mxu0 0.0
    %1441 = vmatprep.subr.mxu0 0.0
    %1442 = vmatpush1.msra.mxu0 0.0
    %1443 = vmatprep.subr.mxu0 0.0
    %1444 = vmatpush1.msra.mxu0 0.0
    %1445 = vmatprep.subr.mxu0 0.0
    %1446 = vmatpush1.msra.mxu0 0.0
    %1447 = vmatprep.subr.mxu0 0.0
    %1448 = vmatpush1.msra.mxu0 0.0
    %1449 = vmatprep.subr.mxu0 0.0
    %1450 = vmatpush1.msra.mxu0 0.0
    %1451 = vmatprep.subr.mxu0 0.0
    %1452 = vmatpush1.msra.mxu0 0.0
    %1453 = vmatprep.subr.mxu0 0.0
    %1454 = vmatpush1.msra.mxu0 0.0
    %1455 = vmatprep.subr.mxu0 0.0
    %1456 = vmatpush1.msra.mxu0 0.0
    %1457 = vmatprep.subr.mxu0 0.0
    %1458 = vmatpush1.msra.mxu0 0.0
    %1459 = vmatprep.subr.mxu0 0.0
    %1460 = vmatpush1.msra.mxu0 0.0
    %1461 = vmatprep.subr.mxu0 0.0
    %1462 = vmatpush1.msra.mxu0 0.0
    %1463 = vmatprep.subr.mxu0 0.0
    %1464 = vmatpush1.msra.mxu0 0.0
    %1465 = vmatprep.subr.mxu0 0.0
    %1466 = vmatpush1.msra.mxu0 0.0
    %1467 = vmatprep.mubr.f32.mxu0 0.0
    %1468 = vmatmul.mubr.f32.gmra.mrb[0].mxu0 %v1401
    %v1469 = vpop.f32.mrb[0].mxu0
    %v1470 = vadd.f32 0.0, %v1469
    %v1471 = vpop.f32.mrb[0].mxu0
    %1472 = vdwg.mxu0
    %1475 = vrot.lane.b32.xlu0 %v1090, 8
    %v1476 = vpop.permute.xlu0 %1475
    %1477 = vrot.lane.b32.xlu0 %v1166, 8
    %v1478 = vpop.permute.xlu0 %1477
    %1483 = vrot.lane.b32.xlu0 %v1242, 16
    %v1484 = vpop.permute.xlu0 %1483
    %1485 = vrot.lane.b32.xlu0 %v1318, 16
    %v1486 = vpop.permute.xlu0 %1485
    %1491 = vrot.lane.b32.xlu0 %v1394, 24
    %v1492 = vpop.permute.xlu0 %1491
    %1493 = vrot.lane.b32.xlu0 %v1470, 24
    %v1494 = vpop.permute.xlu0 %1493
    %v1497 = vsel %vm170, %v938, %v1476
    %v1498 = vsel %vm170, %v1014, %v1478
    %vm1499 = vcmask 130048
    %v1500 = vsel %vm1499, %v1497, %v1484
    %v1501 = vsel %vm1499, %v1498, %v1486
    %vm1502 = vcmask 195584
    %v1503 = vsel %vm1502, %v1500, %v1492
    %v1504 = vsel %vm1502, %v1501, %v1494
    %v1505 = vld [vmem:[%s2] sm:$0xff]
    %v1506 = vld [vmem:[%s2 + $0x8] sm:$0xff]
    %v1507 = vld [vmem:[%s2 + $0x10] sm:$0xff]
    %v1508 = vld [vmem:[%s2 + $0x18] sm:$0xff]
    %v1509 = vlaneseq
    %v1510 = vshrl.u32 %v1509, 7
    %v1511 = vsub.s32 2, %v1510
    %v1512 = vrot.slane %v40, %v1511
    %v1514 = vsel %vm43, %v1503, 0
    %v1517 = vsel %vm43, %v1504, 0
    %1519 = vmatprep.subr.mxu0 0.0
    %1520 = vmatpush1.msra.mxu0 %v1505
    %1521 = vmatprep.subr.mxu0 0.0
    %1522 = vmatpush1.msra.mxu0 %v1506
    %1523 = vmatprep.subr.mxu0 0.0
    %1524 = vmatpush1.msra.mxu0 %v1507
    %1525 = vmatprep.subr.mxu0 0.0
    %1526 = vmatpush1.msra.mxu0 %v1508
    %1527 = vmatprep.subr.mxu0 0.0
    %1528 = vmatpush1.msra.mxu0 0.0
    %1529 = vmatprep.subr.mxu0 0.0
    %1530 = vmatpush1.msra.mxu0 0.0
    %1531 = vmatprep.subr.mxu0 0.0
    %1532 = vmatpush1.msra.mxu0 0.0
    %1533 = vmatprep.subr.mxu0 0.0
    %1534 = vmatpush1.msra.mxu0 0.0
    %1535 = vmatprep.subr.mxu0 0.0
    %1536 = vmatpush1.msra.mxu0 0.0
    %1537 = vmatprep.subr.mxu0 0.0
    %1538 = vmatpush1.msra.mxu0 0.0
    %1539 = vmatprep.subr.mxu0 0.0
    %1540 = vmatpush1.msra.mxu0 0.0
    %1541 = vmatprep.subr.mxu0 0.0
    %1542 = vmatpush1.msra.mxu0 0.0
    %1543 = vmatprep.subr.mxu0 0.0
    %1544 = vmatpush1.msra.mxu0 0.0
    %1545 = vmatprep.subr.mxu0 0.0
    %1546 = vmatpush1.msra.mxu0 0.0
    %1547 = vmatprep.subr.mxu0 0.0
    %1548 = vmatpush1.msra.mxu0 0.0
    %1549 = vmatprep.subr.mxu0 0.0
    %1550 = vmatpush1.msra.mxu0 0.0
    %1551 = vmatprep.subr.mxu0 0.0
    %1552 = vmatpush1.msra.mxu0 0.0
    %1553 = vmatprep.subr.mxu0 0.0
    %1554 = vmatpush1.msra.mxu0 0.0
    %1555 = vmatprep.subr.mxu0 0.0
    %1556 = vmatpush1.msra.mxu0 0.0
    %1557 = vmatprep.subr.mxu0 0.0
    %1558 = vmatpush1.msra.mxu0 0.0
    %1559 = vmatprep.subr.mxu0 0.0
    %1560 = vmatpush1.msra.mxu0 0.0
    %1561 = vmatprep.subr.mxu0 0.0
    %1562 = vmatpush1.msra.mxu0 0.0
    %1563 = vmatprep.subr.mxu0 0.0
    %1564 = vmatpush1.msra.mxu0 0.0
    %1565 = vmatprep.subr.mxu0 0.0
    %1566 = vmatpush1.msra.mxu0 0.0
    %1567 = vmatprep.subr.mxu0 0.0
    %1568 = vmatpush1.msra.mxu0 0.0
    %1569 = vmatprep.subr.mxu0 0.0
    %1570 = vmatpush1.msra.mxu0 0.0
    %1571 = vmatprep.subr.mxu0 0.0
    %1572 = vmatpush1.msra.mxu0 0.0
    %1573 = vmatprep.subr.mxu0 0.0
    %1574 = vmatpush1.msra.mxu0 0.0
    %1575 = vmatprep.subr.mxu0 0.0
    %1576 = vmatpush1.msra.mxu0 0.0
    %1577 = vmatprep.subr.mxu0 0.0
    %1578 = vmatpush1.msra.mxu0 0.0
    %1579 = vmatprep.subr.mxu0 0.0
    %1580 = vmatpush1.msra.mxu0 0.0
    %1581 = vmatprep.subr.mxu0 0.0
    %1582 = vmatpush1.msra.mxu0 0.0
    %1583 = vmatprep.mubr.f32.mxu0 0.0
    %1584 = vmatmul.mubr.f32.gmra.mrb[0].mxu0 %v1514
    %v1585 = vpop.f32.mrb[0].mxu0
    %v1586 = vadd.f32 %v1512, %v1585
    %v1587 = vpop.f32.mrb[0].mxu0
    %1588 = vmatprep.mubr.f32.mxu0 0.0
    %1589 = vmatmul.mubr.f32.gmra.mrb[0].mxu0 %v1517
    %v1590 = vpop.f32.mrb[0].mxu0
    %v1591 = vadd.f32 %v1512, %v1590
    %v1592 = vpop.f32.mrb[0].mxu0
    %1593 = vdwg.mxu0
    %v1594 = vadd.f32 %v38, %v1586
    %v1595 = vadd.f32 %v39, %v1591
    %v1596 = vmul.f32 %v1594, %v1594
    %v1597 = vmul.f32 %v1595, %v1595
    %v1598 = vsel %vm43, %v1596, 0.0
    %1599 = vadd.xlane.f32.xlu0 %v1598
    %v1600 = vpop.xlane.xlu0 %1599
    %v1601 = vsel %vm43, %v1597, 0.0
    %1602 = vadd.xlane.f32.xlu0 %v1601
    %v1603 = vpop.xlane.xlu0 %1602
    %v1604 = vmul.f32 %v1600, %v50
    %v1605 = vmul.f32 %v1603, %v50
    %v1606 = vadd.f32 %v1604, 1e-06
    %v1607 = vadd.f32 %v1605, 1e-06
    %v1608 = vrsqrt.pop %v1606
    %v1609 = vrsqrt.pop %v1607
    %v1610 = vmul.f32 %v1594, %v1608
    %v1611 = vmul.f32 %v1595, %v1609
    %v1612 = vlaneseq
    %v1613 = vshrl.u32 %v1612, 7
    %v1614 = vsub.s32 3, %v1613
    %v1615 = vrot.slane %v40, %v1614
    %v1616 = vmul.f32 %v1610, %v1615
    %v1617 = vmul.f32 %v1611, %v1615
    %v1618 = vld [vmem:[%s3] sm:$0xff]
    %v1619 = vld [vmem:[%s3 + $0x8] sm:$0xff]
    %v1620 = vld [vmem:[%s3 + $0x10] sm:$0xff]
    %v1621 = vld [vmem:[%s3 + $0x18] sm:$0xff]
    %v1622 = vlaneseq
    %v1623 = vshrl.u32 %v1622, 7
    %v1624 = vsub.s32 4, %v1623
    %v1625 = vrot.slane %v40, %v1624
    %v1627 = vsel %vm43, %v1616, 0
    %v1630 = vsel %vm43, %v1617, 0
    %1632 = vmatprep.subr.mxu0 0.0
    %1633 = vmatpush1.msra.mxu0 %v1618
    %1634 = vmatprep.subr.mxu0 0.0
    %1635 = vmatpush1.msra.mxu0 %v1619
    %1636 = vmatprep.subr.mxu0 0.0
    %1637 = vmatpush1.msra.mxu0 %v1620
    %1638 = vmatprep.subr.mxu0 0.0
    %1639 = vmatpush1.msra.mxu0 %v1621
    %1640 = vmatprep.subr.mxu0 0.0
    %1641 = vmatpush1.msra.mxu0 0.0
    %1642 = vmatprep.subr.mxu0 0.0
    %1643 = vmatpush1.msra.mxu0 0.0
    %1644 = vmatprep.subr.mxu0 0.0
    %1645 = vmatpush1.msra.mxu0 0.0
    %1646 = vmatprep.subr.mxu0 0.0
    %1647 = vmatpush1.msra.mxu0 0.0
    %1648 = vmatprep.subr.mxu0 0.0
    %1649 = vmatpush1.msra.mxu0 0.0
    %1650 = vmatprep.subr.mxu0 0.0
    %1651 = vmatpush1.msra.mxu0 0.0
    %1652 = vmatprep.subr.mxu0 0.0
    %1653 = vmatpush1.msra.mxu0 0.0
    %1654 = vmatprep.subr.mxu0 0.0
    %1655 = vmatpush1.msra.mxu0 0.0
    %1656 = vmatprep.subr.mxu0 0.0
    %1657 = vmatpush1.msra.mxu0 0.0
    %1658 = vmatprep.subr.mxu0 0.0
    %1659 = vmatpush1.msra.mxu0 0.0
    %1660 = vmatprep.subr.mxu0 0.0
    %1661 = vmatpush1.msra.mxu0 0.0
    %1662 = vmatprep.subr.mxu0 0.0
    %1663 = vmatpush1.msra.mxu0 0.0
    %1664 = vmatprep.subr.mxu0 0.0
    %1665 = vmatpush1.msra.mxu0 0.0
    %1666 = vmatprep.subr.mxu0 0.0
    %1667 = vmatpush1.msra.mxu0 0.0
    %1668 = vmatprep.subr.mxu0 0.0
    %1669 = vmatpush1.msra.mxu0 0.0
    %1670 = vmatprep.subr.mxu0 0.0
    %1671 = vmatpush1.msra.mxu0 0.0
    %1672 = vmatprep.subr.mxu0 0.0
    %1673 = vmatpush1.msra.mxu0 0.0
    %1674 = vmatprep.subr.mxu0 0.0
    %1675 = vmatpush1.msra.mxu0 0.0
    %1676 = vmatprep.subr.mxu0 0.0
    %1677 = vmatpush1.msra.mxu0 0.0
    %1678 = vmatprep.subr.mxu0 0.0
    %1679 = vmatpush1.msra.mxu0 0.0
    %1680 = vmatprep.subr.mxu0 0.0
    %1681 = vmatpush1.msra.mxu0 0.0
    %1682 = vmatprep.subr.mxu0 0.0
    %1683 = vmatpush1.msra.mxu0 0.0
    %1684 = vmatprep.subr.mxu0 0.0
    %1685 = vmatpush1.msra.mxu0 0.0
    %1686 = vmatprep.subr.mxu0 0.0
    %1687 = vmatpush1.msra.mxu0 0.0
    %1688 = vmatprep.subr.mxu0 0.0
    %1689 = vmatpush1.msra.mxu0 0.0
    %1690 = vmatprep.subr.mxu0 0.0
    %1691 = vmatpush1.msra.mxu0 0.0
    %1692 = vmatprep.subr.mxu0 0.0
    %1693 = vmatpush1.msra.mxu0 0.0
    %1694 = vmatprep.subr.mxu0 0.0
    %1695 = vmatpush1.msra.mxu0 0.0
    %1696 = vmatprep.mubr.f32.mxu0 0.0
    %1697 = vmatmul.mubr.f32.gmra.mrb[0].mxu0 %v1627
    %v1698 = vpop.f32.mrb[0].mxu0
    %v1699 = vadd.f32 %v1625, %v1698
    %v1700 = vpop.f32.mrb[0].mxu0
    %1701 = vmatprep.mubr.f32.mxu0 0.0
    %1702 = vmatmul.mubr.f32.gmra.mrb[0].mxu0 %v1630
    %v1703 = vpop.f32.mrb[0].mxu0
    %v1704 = vadd.f32 %v1625, %v1703
    %v1705 = vpop.f32.mrb[0].mxu0
    %1706 = vdwg.mxu0
    %v1707 = vxor.u32 %v1699, 2147483648
    %v1708 = vxor.u32 %v1704, 2147483648
    %v1709 = vmul.f32 %v1707, 1.442695
    %v1710 = vpow.pop %v1709
    %v1711 = vmul.f32 %v1708, 1.442695
    %v1712 = vpow.pop %v1711
    %v1713 = vadd.f32 %v1710, 1.0
    %v1714 = vadd.f32 %v1712, 1.0
    %v1715 = vrcp.pop %v1713
    %v1716 = vmul.f32 1.0, %v1715
    %v1717 = vrcp.pop %v1714
    %v1718 = vmul.f32 1.0, %v1717
    %v1719 = vmul.f32 %v1699, %v1716
    %v1720 = vmul.f32 %v1704, %v1718
    %1723 = vrot.lane.b32.xlu0 %v1699, 64
    %v1724 = vpop.permute.xlu0 %1723
    %1725 = vrot.lane.b32.xlu0 %v1704, 64
    %v1726 = vpop.permute.xlu0 %1725
    %v1729 = vmul.f32 %v1719, %v1724
    %v1730 = vmul.f32 %v1720, %v1726
    %v1731 = vld [vmem:[%s4] sm:$0xff]
    %v1732 = vld [vmem:[%s4 + $0x8] sm:$0xff]
    %v1733 = vld [vmem:[%s4 + $0x10] sm:$0xff]
    %v1734 = vld [vmem:[%s4 + $0x18] sm:$0xff]
    %v1735 = vld [vmem:[%s4 + $0x20] sm:$0xff]
    %v1736 = vld [vmem:[%s4 + $0x28] sm:$0xff]
    %v1737 = vld [vmem:[%s4 + $0x30] sm:$0xff]
    %v1738 = vld [vmem:[%s4 + $0x38] sm:$0xff]
    %v1739 = vlaneseq
    %v1740 = vshrl.u32 %v1739, 7
    %v1741 = vsub.s32 5, %v1740
    %v1742 = vrot.slane %v40, %v1741
    %vm1743 = vcmask 523264
    %v1745 = vsel %vm1743, %v1729, 0
    %v1748 = vsel %vm1743, %v1730, 0
    %1750 = vmatprep.subr.mxu0 0.0
    %1751 = vmatpush1.msra.mxu0 %v1731
    %1752 = vmatprep.subr.mxu0 0.0
    %1753 = vmatpush1.msra.mxu0 %v1732
    %1754 = vmatprep.subr.mxu0 0.0
    %1755 = vmatpush1.msra.mxu0 %v1733
    %1756 = vmatprep.subr.mxu0 0.0
    %1757 = vmatpush1.msra.mxu0 %v1734
    %1758 = vmatprep.subr.mxu0 0.0
    %1759 = vmatpush1.msra.mxu0 %v1735
    %1760 = vmatprep.subr.mxu0 0.0
    %1761 = vmatpush1.msra.mxu0 %v1736
    %1762 = vmatprep.subr.mxu0 0.0
    %1763 = vmatpush1.msra.mxu0 %v1737
    %1764 = vmatprep.subr.mxu0 0.0
    %1765 = vmatpush1.msra.mxu0 %v1738
    %1766 = vmatprep.subr.mxu0 0.0
    %1767 = vmatpush1.msra.mxu0 0.0
    %1768 = vmatprep.subr.mxu0 0.0
    %1769 = vmatpush1.msra.mxu0 0.0
    %1770 = vmatprep.subr.mxu0 0.0
    %1771 = vmatpush1.msra.mxu0 0.0
    %1772 = vmatprep.subr.mxu0 0.0
    %1773 = vmatpush1.msra.mxu0 0.0
    %1774 = vmatprep.subr.mxu0 0.0
    %1775 = vmatpush1.msra.mxu0 0.0
    %1776 = vmatprep.subr.mxu0 0.0
    %1777 = vmatpush1.msra.mxu0 0.0
    %1778 = vmatprep.subr.mxu0 0.0
    %1779 = vmatpush1.msra.mxu0 0.0
    %1780 = vmatprep.subr.mxu0 0.0
    %1781 = vmatpush1.msra.mxu0 0.0
    %1782 = vmatprep.subr.mxu0 0.0
    %1783 = vmatpush1.msra.mxu0 0.0
    %1784 = vmatprep.subr.mxu0 0.0
    %1785 = vmatpush1.msra.mxu0 0.0
    %1786 = vmatprep.subr.mxu0 0.0
    %1787 = vmatpush1.msra.mxu0 0.0
    %1788 = vmatprep.subr.mxu0 0.0
    %1789 = vmatpush1.msra.mxu0 0.0
    %1790 = vmatprep.subr.mxu0 0.0
    %1791 = vmatpush1.msra.mxu0 0.0
    %1792 = vmatprep.subr.mxu0 0.0
    %1793 = vmatpush1.msra.mxu0 0.0
    %1794 = vmatprep.subr.mxu0 0.0
    %1795 = vmatpush1.msra.mxu0 0.0
    %1796 = vmatprep.subr.mxu0 0.0
    %1797 = vmatpush1.msra.mxu0 0.0
    %1798 = vmatprep.subr.mxu0 0.0
    %1799 = vmatpush1.msra.mxu0 0.0
    %1800 = vmatprep.subr.mxu0 0.0
    %1801 = vmatpush1.msra.mxu0 0.0
    %1802 = vmatprep.subr.mxu0 0.0
    %1803 = vmatpush1.msra.mxu0 0.0
    %1804 = vmatprep.subr.mxu0 0.0
    %1805 = vmatpush1.msra.mxu0 0.0
    %1806 = vmatprep.subr.mxu0 0.0
    %1807 = vmatpush1.msra.mxu0 0.0
    %1808 = vmatprep.subr.mxu0 0.0
    %1809 = vmatpush1.msra.mxu0 0.0
    %1810 = vmatprep.subr.mxu0 0.0
    %1811 = vmatpush1.msra.mxu0 0.0
    %1812 = vmatprep.subr.mxu0 0.0
    %1813 = vmatpush1.msra.mxu0 0.0
    %1814 = vmatprep.mubr.f32.mxu0 0.0
    %1815 = vmatmul.mubr.f32.gmra.mrb[0].mxu0 %v1745
    %v1816 = vpop.f32.mrb[0].mxu0
    %v1817 = vadd.f32 %v1742, %v1816
    %v1818 = vpop.f32.mrb[0].mxu0
    %1819 = vmatprep.mubr.f32.mxu0 0.0
    %1820 = vmatmul.mubr.f32.gmra.mrb[0].mxu0 %v1748
    %v1821 = vpop.f32.mrb[0].mxu0
    %v1822 = vadd.f32 %v1742, %v1821
    %v1823 = vpop.f32.mrb[0].mxu0
    %1824 = vdwg.mxu0
    %v1825 = vadd.f32 %v1594, %v1817
    %v1826 = vadd.f32 %v1595, %v1822
    %1827 = vst.msk [vmem:[#allocation5] sm:$0xff] %vm43, %v1825
    %1828 = vst.msk [vmem:[#allocation5 + $0x8] sm:$0xff] %vm43, %v1826
    // Predicated region
    $region30: #{tpu_custom_call.1} parent=1 // pred_check
      _
    $region31: #{tpu_custom_call.1} parent=1 // pred_check_branch
      %1830 = sbr.rel (0) target = $region33
    $region32: #{tpu_custom_call.1} parent=1 // pred_region
      %s1832 = ssub.s32 256, 256
      %1833 = vsyncadd [#allocation4], %s1832
      %s1834 = sshll.u32 [#allocation5], 4
      %s1835 = int_to_ptr.vmem [resolvable:$true] %s1834
      %1840 = dma.vmem_to_hbm [thread:$0]  %s1835, 256, %s6, [#allocation4], 128, 128, 8
    $region33: #{tpu_custom_call.1} parent=1 // pred_fallthru
      _
    // Predicated region
    $region34: #{tpu_custom_call.1} parent=1 // pred_check
      _
    $region35: #{tpu_custom_call.1} parent=1 // pred_check_branch
      %1842 = sbr.rel (0) target = $region37
    $region36: #{tpu_custom_call.1} parent=1 // pred_region
      %1843 = dma.done [#allocation4], 256
    $region37: #{tpu_custom_call.1} parent=1 // pred_fallthru
      _
    %1844 = vsyncpa [#allocation3], 1
    %1845 = vsyncpa [#allocation4], 1

</llo_original>
